<compile_context>
chip_gen: v7x
topology: tpu7x:2x2x1
jax: 0.10.0
libtpu: 0.0.40
codegen_flags: <defaults>
</compile_context>

<pallas_src>
import jax
import jax.numpy as jnp
import numpy as np
from jax import lax
from jax.experimental import pallas as pl
from jax.experimental.pallas import tpu as pltpu

# Module hyper-parameters (undefined globals in the original snippet — chosen small).
INPUT_SIZE = 8
HIDDEN_SIZE = 32
NUM_LAYERS = 2
SEQ_LEN = 8
BATCH = 2

BP = 8  # sublane-aligned padded batch block (rows per timestep)


# ----------------------------------------------------------------------------
# Pallas kernel: skew-fused 2-layer LSTM scan + fused output head, all in VMEM.
#
# Packed gate-lane layout (width 8H = 256), blocks of H lanes:
#   [ i0 | i1 | f0 | f1 | g0 | g1 | o0 | o1 ]     (0 = layer 0, 1 = layer 1)
# Carries are h_both = [h0 | h1], c_both = [c0 | c1], each (BP, 2H).
# ----------------------------------------------------------------------------
def rnn_kernel(x_ref,      # ((T+1)*BP, I)  time-major, batch-padded, +1 zero step
               wx_ref,     # (I, 8H)   Wih0 in layer-0 gate blocks, zeros elsewhere
               b_ref,      # (1, 8H)   b_ih0+b_hh0 in layer-0 blocks, b_ih1+b_hh1 in layer-1
               wrec_ref,   # (2H, 8H)  rows 0:H -> [Whh0 | Wih1], rows H:2H -> [0 | Whh1]
               wout_ref,   # (2H, 128) fused heads (rows 0:H zero, cols 4:128 zero)
               bout_ref,   # (1, 128)
               out_ref,    # (BP, 128)
               gx_ref):    # ((T+1)*BP, 8H) scratch: x-side gates + biases
    TB = x_ref.shape[0]
    Bp = out_ref.shape[0]
    T = TB // Bp - 1
    H = wrec_ref.shape[0] // 2
    DEF = lax.Precision.DEFAULT

    wrec = wrec_ref[...]  # held as a VMEM value across the unrolled serial loop

    # ---- x-side gate slab for all timesteps: ONE batched MXU matmul (off the
    # recurrent critical path).  Layer-1 lanes of wx are zero, so those lanes of
    # the slab carry just b1 — making the per-step add a single 256-lane add.
    gx_ref[...] = (jnp.dot(x_ref[...], wx_ref[...],
                           preferred_element_type=jnp.float32, precision=DEF)
                   + b_ref[...])

    # ---- prologue: layer-0 step 0 (h_{-1}=c_{-1}=0 ⇒ gates are slab row-block 0,
    # no matmul).  Layer-1 has not started, so its half of the carry stays zero.
    g0 = gx_ref[pl.ds(0, Bp), :]
    sig0 = jax.nn.sigmoid(g0)
    th0 = jnp.tanh(g0)
    c00 = sig0[:, 0:H] * th0[:, 4 * H:5 * H]          # i0 * g0   (f0 * c_{-1} = 0)
    h00 = sig0[:, 6 * H:7 * H] * jnp.tanh(c00)        # o0 * tanh(c)
    zH = jnp.zeros((Bp, H), jnp.float32)
    h_both = jnp.concatenate([h00, zH], axis=1)       # [h0_0 | h1_{-1}=0]
    c_both = jnp.concatenate([c00, zH], axis=1)

    # ---- skew-fused recurrence: iteration k computes layer-0 step k and
    # layer-1 step k-1 with ONE 256-lane MXU push and one sigmoid/tanh pair.
    def fused_step(k, carry):
        h, c = carry                                   # [h0_{k-1}|h1_{k-2}]
        r = pl.ds(pl.multiple_of(k * Bp, Bp), Bp)      # aligned (8, 256) slab tile
        gates = (jnp.dot(h, wrec, preferred_element_type=jnp.float32,
                         precision=DEF)
                 + gx_ref[r, :])                       # (Bp, 8H)
        sig = jax.nn.sigmoid(gates)                    # 2 EUP pushes total
        th = jnp.tanh(gates)
        c_new = sig[:, 2 * H:4 * H] * c + sig[:, 0:2 * H] * th[:, 4 * H:6 * H]
        h_new = sig[:, 6 * H:8 * H] * jnp.tanh(c_new)
        return h_new, c_new                            # [h0_k | h1_{k-1}]

    # k = 1..T; iteration T consumes the zero-padded extra x row-block (its
    # layer-0 half is dead) and produces layer-1's final step T-1.
    h_both, _ = lax.fori_loop(1, T + 1, fused_step, (h_both, c_both),
                              unroll=True)

    # ---- fused heads: rows 0:H of wout are zero so the dead layer-0 half of the
    # carry drops out; 128-lane output avoids a masked partial store.
    out_ref[...] = (jnp.dot(h_both, wout_ref[...],
                            preferred_element_type=jnp.float32, precision=DEF)
                    + bout_ref[...])


# ----------------------------------------------------------------------------
# One-time parameter packing (outside the per-call jit): transposes, bias sums,
# gate-column interleave, block-diagonal recurrent weight, head concat+pad.
# ----------------------------------------------------------------------------
def prepare_params(p, H=HIDDEN_SIZE):
    G = 4 * H

    def interleave(a, b):
        # a, b: (rows, 4H) in PyTorch gate order [i f g o]
        # -> (rows, 8H) with column blocks [a_i b_i a_f b_f a_g b_g a_o b_o]
        a4 = a.reshape(a.shape[0], 4, H)
        b4 = b.reshape(b.shape[0], 4, H)
        return jnp.stack([a4, b4], axis=2).reshape(a.shape[0], 8 * H)

    wih0_t = jnp.asarray(p["w_ih0"], jnp.float32).T        # (I, 4H)
    whh0_t = jnp.asarray(p["w_hh0"], jnp.float32).T        # (H, 4H)
    wih1_t = jnp.asarray(p["w_ih1"], jnp.float32).T        # (H, 4H)
    whh1_t = jnp.asarray(p["w_hh1"], jnp.float32).T        # (H, 4H)
    I = wih0_t.shape[0]

    b0 = (p["b_ih0"] + p["b_hh0"])[None, :].astype(jnp.float32)   # (1, 4H)
    b1 = (p["b_ih1"] + p["b_hh1"])[None, :].astype(jnp.float32)   # (1, 4H)

    wx = interleave(wih0_t, jnp.zeros((I, G), jnp.float32))       # (I, 8H)
    b_wide = interleave(b0, b1)                                   # (1, 8H)
    wrec = jnp.concatenate(
        [interleave(whh0_t, wih1_t),                              # h0 rows
         interleave(jnp.zeros((H, G), jnp.float32), whh1_t)],     # h1 rows
        axis=0)                                                   # (2H, 8H)

    # Fused, lane-dense head: concat(fc_position, fc_velocity) -> (H, 4),
    # placed in rows H:2H (the h1 half of the carry), padded to 128 lanes.
    w_head = jnp.concatenate([p["w_pos"], p["w_vel"]], 0).T.astype(jnp.float32)
    wout = jnp.zeros((2 * H, 128), jnp.float32).at[H:, :4].set(w_head)
    bout = jnp.zeros((1, 128), jnp.float32).at[0, :4].set(
        jnp.concatenate([p["b_pos"], p["b_vel"]]).astype(jnp.float32))

    return {"wx": wx, "b": b_wide, "wrec": wrec, "wout": wout, "bout": bout}


# ----------------------------------------------------------------------------
# Forward wrapper: layout plumbing + pallas_call.
# ----------------------------------------------------------------------------
@jax.jit
def rnn_model_forward(x_bti, pp):
    """x_bti: (B, T, I) float32, batch-first like nn.LSTM(batch_first=True)."""
    B, T, I = x_bti.shape
    H = pp["wrec"].shape[0] // 2

    # time-major, batch padded to 8 sublane-aligned rows, plus one zero timestep
    # consumed by the final skewed iteration; rows t*8..t*8+7 hold timestep t.
    x_tbi = jnp.transpose(x_bti, (1, 0, 2))
    x_pad = jnp.zeros((T + 1, BP, I), jnp.float32).at[:T, :B, :].set(x_tbi)
    x_flat = x_pad.reshape((T + 1) * BP, I)

    vmem = lambda: pl.BlockSpec(memory_space=pltpu.MemorySpace.VMEM)
    out = pl.pallas_call(
        rnn_kernel,
        out_shape=jax.ShapeDtypeStruct((BP, 128), jnp.float32),
        in_specs=[vmem() for _ in range(6)],
        out_specs=vmem(),
        scratch_shapes=[pltpu.VMEM(((T + 1) * BP, 8 * H), jnp.float32)],
    )(x_flat, pp["wx"], pp["b"], pp["wrec"], pp["wout"], pp["bout"])
    return out[:B, :4]


# ----------------------------------------------------------------------------
# Deterministic parameter init (PyTorch-style uniform(-1/sqrt(H), 1/sqrt(H)))
# ----------------------------------------------------------------------------
def init_params(key):
    H, I = HIDDEN_SIZE, INPUT_SIZE
    k = 1.0 / np.sqrt(H)
    names_shapes = [
        ("w_ih0", (4 * H, I)), ("w_hh0", (4 * H, H)),
        ("b_ih0", (4 * H,)), ("b_hh0", (4 * H,)),
        ("w_ih1", (4 * H, H)), ("w_hh1", (4 * H, H)),
        ("b_ih1", (4 * H,)), ("b_hh1", (4 * H,)),
        ("w_pos", (2, H)), ("b_pos", (2,)),
        ("w_vel", (2, H)), ("b_vel", (2,)),
    ]
    keys = jax.random.split(key, len(names_shapes))
    return {n: jax.random.uniform(kk, s, jnp.float32, -k, k)
            for kk, (n, s) in zip(keys, names_shapes)}


# ----------------------------------------------------------------------------
# Pure-JAX reference (mirrors torch.nn.LSTM + the two Linear heads, eval mode)
# ----------------------------------------------------------------------------
def reference_forward(x, p):
    B, T, _ = x.shape
    H = HIDDEN_SIZE

    def layer(xs, wih, whh, bih, bhh):
        h = jnp.zeros((B, H), jnp.float32)
        c = jnp.zeros((B, H), jnp.float32)
        outs = []
        for t in range(T):
            gates = xs[:, t, :] @ wih.T + bih + h @ whh.T + bhh
            i = jax.nn.sigmoid(gates[:, :H])
            f = jax.nn.sigmoid(gates[:, H:2 * H])
            g = jnp.tanh(gates[:, 2 * H:3 * H])
            o = jax.nn.sigmoid(gates[:, 3 * H:])
            c = f * c + i * g
            h = o * jnp.tanh(c)
            outs.append(h)
        return jnp.stack(outs, axis=1), h

    out0, _ = layer(x, p["w_ih0"], p["w_hh0"], p["b_ih0"], p["b_hh0"])
    _, h_last = layer(out0, p["w_ih1"], p["w_hh1"], p["b_ih1"], p["b_hh1"])
    pos = h_last @ p["w_pos"].T + p["b_pos"]
    vel = h_last @ p["w_vel"].T + p["b_vel"]
    return jnp.concatenate([pos, vel], axis=1)


if __name__ == "__main__":
    key = jax.random.PRNGKey(0)
    k_param, k_x = jax.random.split(key)
    params = init_params(k_param)
    packed = prepare_params(params)          # one-time weight packing
    x = jax.random.normal(k_x, (BATCH, SEQ_LEN, INPUT_SIZE), jnp.float32)

    out = jax.block_until_ready(rnn_model_forward(x, packed))

    ref = reference_forward(x, params)
    assert out.shape == (BATCH, 4), out.shape
    np.testing.assert_allclose(np.asarray(out), np.asarray(ref), atol=5e-3, rtol=5e-3)

    print("KERNEL_OK")
</pallas_src>

<mosaic_0001>
module attributes {stable_mosaic.version = 11 : i64} {
  func.func @rnn_kernel(%arg0: memref<72x8xf32, #tpu.memory_space<vmem>>, %arg1: memref<8x256xf32, #tpu.memory_space<vmem>>, %arg2: memref<1x256xf32, #tpu.memory_space<vmem>>, %arg3: memref<64x256xf32, #tpu.memory_space<vmem>>, %arg4: memref<64x128xf32, #tpu.memory_space<vmem>>, %arg5: memref<1x128xf32, #tpu.memory_space<vmem>>, %arg6: memref<8x128xf32, #tpu.memory_space<vmem>>, %arg7: memref<72x256xf32, #tpu.memory_space<vmem>>) attributes {dimension_semantics = [], scalar_prefetch = 0 : i64, scratch_operands = 1 : i64, tpu.core_type = #tpu.core_type<tc>} {
    %c0 = arith.constant 0 : index
    %c0_0 = arith.constant 0 : index
    %0 = vector.load %arg3[%c0, %c0_0] : memref<64x256xf32, #tpu.memory_space<vmem>>, vector<64x256xf32>
    %c0_1 = arith.constant 0 : index
    %c0_2 = arith.constant 0 : index
    %1 = vector.load %arg0[%c0_1, %c0_2] : memref<72x8xf32, #tpu.memory_space<vmem>>, vector<72x8xf32>
    %c0_3 = arith.constant 0 : index
    %c0_4 = arith.constant 0 : index
    %2 = vector.load %arg1[%c0_3, %c0_4] : memref<8x256xf32, #tpu.memory_space<vmem>>, vector<8x256xf32>
    %cst = arith.constant dense<0.000000e+00> : vector<72x256xf32>
    %3 = tpu.matmul %1, %2, %cst {dimension_numbers = #tpu.dot_dimension_numbers<[1], [0], [0], [1], [0, 0, 1, 1], [], []>} : vector<72x8xf32>, vector<8x256xf32>, vector<72x256xf32> -> vector<72x256xf32>
    %c0_5 = arith.constant 0 : index
    %c0_6 = arith.constant 0 : index
    %4 = vector.load %arg2[%c0_5, %c0_6] : memref<1x256xf32, #tpu.memory_space<vmem>>, vector<1x256xf32>
    %5 = vector.broadcast %4 : vector<1x256xf32> to vector<72x256xf32>
    %6 = arith.addf %3, %5 : vector<72x256xf32>
    %c0_7 = arith.constant 0 : index
    %c0_8 = arith.constant 0 : index
    %7 = vector.load %arg7[%c0_7, %c0_8] : memref<72x256xf32, #tpu.memory_space<vmem>>, vector<72x256xf32>
    tpu.vector_store %arg7[%c0_7, %c0_8], %6 {strides = array<i32>} : memref<72x256xf32, #tpu.memory_space<vmem>>, vector<72x256xf32>,
    %c0_9 = arith.constant 0 : index
    %c0_10 = arith.constant 0 : index
    %8 = vector.load %arg7[%c0_9, %c0_10] : memref<72x256xf32, #tpu.memory_space<vmem>>, vector<8x256xf32>
    %9 = arith.negf %8 : vector<8x256xf32>
    %10 = math.exp %9 : vector<8x256xf32>
    %cst_11 = arith.constant 1.000000e+00 : f32
    %11 = vector.broadcast %cst_11 : f32 to vector<8x256xf32>
    %12 = arith.addf %11, %10 : vector<8x256xf32>
    %13 = arith.divf %11, %12 : vector<8x256xf32>
    %14 = math.tanh %8 : vector<8x256xf32>
    %15 = vector.extract_strided_slice %13 {offsets = [0, 0], sizes = [8, 32], strides = [1, 1]} : vector<8x256xf32> to vector<8x32xf32>
    %16 = vector.extract_strided_slice %14 {offsets = [0, 128], sizes = [8, 32], strides = [1, 1]} : vector<8x256xf32> to vector<8x32xf32>
    %17 = arith.mulf %15, %16 : vector<8x32xf32>
    %18 = vector.extract_strided_slice %13 {offsets = [0, 192], sizes = [8, 32], strides = [1, 1]} : vector<8x256xf32> to vector<8x32xf32>
    %19 = math.tanh %17 : vector<8x32xf32>
    %20 = arith.mulf %18, %19 : vector<8x32xf32>
    %cst_12 = arith.constant 0.000000e+00 : f32
    %21 = vector.broadcast %cst_12 : f32 to vector<8x32xf32>
    %22 = tpu.concatenate %20, %21 in 1 : vector<8x32xf32>, vector<8x32xf32> -> vector<8x64xf32>
    %23 = tpu.concatenate %17, %21 in 1 : vector<8x32xf32>, vector<8x32xf32> -> vector<8x64xf32>
    %c1_i32 = arith.constant 1 : i32
    %c8_i32 = arith.constant 8 : i32
    %24 = arith.muli %c1_i32, %c8_i32 : i32
    %25 = tpu.assume_multiple %24, 8 : i32
    %cst_13 = arith.constant dense<0.000000e+00> : vector<8x256xf32>
    %26 = tpu.matmul %22, %0, %cst_13 {dimension_numbers = #tpu.dot_dimension_numbers<[1], [0], [0], [1], [0, 0, 1, 1], [], []>} : vector<8x64xf32>, vector<64x256xf32>, vector<8x256xf32> -> vector<8x256xf32>
    %27 = arith.index_cast %25 : i32 to index
    %c0_14 = arith.constant 0 : index
    %28 = vector.load %arg7[%27, %c0_14] : memref<72x256xf32, #tpu.memory_space<vmem>>, vector<8x256xf32>
    %29 = arith.addf %26, %28 : vector<8x256xf32>
    %30 = arith.negf %29 : vector<8x256xf32>
    %31 = math.exp %30 : vector<8x256xf32>
    %cst_15 = arith.constant 1.000000e+00 : f32
    %32 = vector.broadcast %cst_15 : f32 to vector<8x256xf32>
    %33 = arith.addf %32, %31 : vector<8x256xf32>
    %34 = arith.divf %32, %33 : vector<8x256xf32>
    %35 = math.tanh %29 : vector<8x256xf32>
    %36 = vector.extract_strided_slice %34 {offsets = [0, 64], sizes = [8, 64], strides = [1, 1]} : vector<8x256xf32> to vector<8x64xf32>
    %37 = arith.mulf %36, %23 : vector<8x64xf32>
    %38 = vector.extract_strided_slice %34 {offsets = [0, 0], sizes = [8, 64], strides = [1, 1]} : vector<8x256xf32> to vector<8x64xf32>
    %39 = vector.extract_strided_slice %35 {offsets = [0, 128], sizes = [8, 64], strides = [1, 1]} : vector<8x256xf32> to vector<8x64xf32>
    %40 = arith.mulf %38, %39 : vector<8x64xf32>
    %41 = arith.addf %37, %40 : vector<8x64xf32>
    %42 = vector.extract_strided_slice %34 {offsets = [0, 192], sizes = [8, 64], strides = [1, 1]} : vector<8x256xf32> to vector<8x64xf32>
    %43 = math.tanh %41 : vector<8x64xf32>
    %44 = arith.mulf %42, %43 : vector<8x64xf32>
    %c2_i32 = arith.constant 2 : i32
    %c8_i32_16 = arith.constant 8 : i32
    %45 = arith.muli %c2_i32, %c8_i32_16 : i32
    %46 = tpu.assume_multiple %45, 8 : i32
    %cst_17 = arith.constant dense<0.000000e+00> : vector<8x256xf32>
    %47 = tpu.matmul %44, %0, %cst_17 {dimension_numbers = #tpu.dot_dimension_numbers<[1], [0], [0], [1], [0, 0, 1, 1], [], []>} : vector<8x64xf32>, vector<64x256xf32>, vector<8x256xf32> -> vector<8x256xf32>
    %48 = arith.index_cast %46 : i32 to index
    %c0_18 = arith.constant 0 : index
    %49 = vector.load %arg7[%48, %c0_18] : memref<72x256xf32, #tpu.memory_space<vmem>>, vector<8x256xf32>
    %50 = arith.addf %47, %49 : vector<8x256xf32>
    %51 = arith.negf %50 : vector<8x256xf32>
    %52 = math.exp %51 : vector<8x256xf32>
    %cst_19 = arith.constant 1.000000e+00 : f32
    %53 = vector.broadcast %cst_19 : f32 to vector<8x256xf32>
    %54 = arith.addf %53, %52 : vector<8x256xf32>
    %55 = arith.divf %53, %54 : vector<8x256xf32>
    %56 = math.tanh %50 : vector<8x256xf32>
    %57 = vector.extract_strided_slice %55 {offsets = [0, 64], sizes = [8, 64], strides = [1, 1]} : vector<8x256xf32> to vector<8x64xf32>
    %58 = arith.mulf %57, %41 : vector<8x64xf32>
    %59 = vector.extract_strided_slice %55 {offsets = [0, 0], sizes = [8, 64], strides = [1, 1]} : vector<8x256xf32> to vector<8x64xf32>
    %60 = vector.extract_strided_slice %56 {offsets = [0, 128], sizes = [8, 64], strides = [1, 1]} : vector<8x256xf32> to vector<8x64xf32>
    %61 = arith.mulf %59, %60 : vector<8x64xf32>
    %62 = arith.addf %58, %61 : vector<8x64xf32>
    %63 = vector.extract_strided_slice %55 {offsets = [0, 192], sizes = [8, 64], strides = [1, 1]} : vector<8x256xf32> to vector<8x64xf32>
    %64 = math.tanh %62 : vector<8x64xf32>
    %65 = arith.mulf %63, %64 : vector<8x64xf32>
    %c3_i32 = arith.constant 3 : i32
    %c8_i32_20 = arith.constant 8 : i32
    %66 = arith.muli %c3_i32, %c8_i32_20 : i32
    %67 = tpu.assume_multiple %66, 8 : i32
    %cst_21 = arith.constant dense<0.000000e+00> : vector<8x256xf32>
    %68 = tpu.matmul %65, %0, %cst_21 {dimension_numbers = #tpu.dot_dimension_numbers<[1], [0], [0], [1], [0, 0, 1, 1], [], []>} : vector<8x64xf32>, vector<64x256xf32>, vector<8x256xf32> -> vector<8x256xf32>
    %69 = arith.index_cast %67 : i32 to index
    %c0_22 = arith.constant 0 : index
    %70 = vector.load %arg7[%69, %c0_22] : memref<72x256xf32, #tpu.memory_space<vmem>>, vector<8x256xf32>
    %71 = arith.addf %68, %70 : vector<8x256xf32>
    %72 = arith.negf %71 : vector<8x256xf32>
    %73 = math.exp %72 : vector<8x256xf32>
    %cst_23 = arith.constant 1.000000e+00 : f32
    %74 = vector.broadcast %cst_23 : f32 to vector<8x256xf32>
    %75 = arith.addf %74, %73 : vector<8x256xf32>
    %76 = arith.divf %74, %75 : vector<8x256xf32>
    %77 = math.tanh %71 : vector<8x256xf32>
    %78 = vector.extract_strided_slice %76 {offsets = [0, 64], sizes = [8, 64], strides = [1, 1]} : vector<8x256xf32> to vector<8x64xf32>
    %79 = arith.mulf %78, %62 : vector<8x64xf32>
    %80 = vector.extract_strided_slice %76 {offsets = [0, 0], sizes = [8, 64], strides = [1, 1]} : vector<8x256xf32> to vector<8x64xf32>
    %81 = vector.extract_strided_slice %77 {offsets = [0, 128], sizes = [8, 64], strides = [1, 1]} : vector<8x256xf32> to vector<8x64xf32>
    %82 = arith.mulf %80, %81 : vector<8x64xf32>
    %83 = arith.addf %79, %82 : vector<8x64xf32>
    %84 = vector.extract_strided_slice %76 {offsets = [0, 192], sizes = [8, 64], strides = [1, 1]} : vector<8x256xf32> to vector<8x64xf32>
    %85 = math.tanh %83 : vector<8x64xf32>
    %86 = arith.mulf %84, %85 : vector<8x64xf32>
    %c4_i32 = arith.constant 4 : i32
    %c8_i32_24 = arith.constant 8 : i32
    %87 = arith.muli %c4_i32, %c8_i32_24 : i32
    %88 = tpu.assume_multiple %87, 8 : i32
    %cst_25 = arith.constant dense<0.000000e+00> : vector<8x256xf32>
    %89 = tpu.matmul %86, %0, %cst_25 {dimension_numbers = #tpu.dot_dimension_numbers<[1], [0], [0], [1], [0, 0, 1, 1], [], []>} : vector<8x64xf32>, vector<64x256xf32>, vector<8x256xf32> -> vector<8x256xf32>
    %90 = arith.index_cast %88 : i32 to index
    %c0_26 = arith.constant 0 : index
    %91 = vector.load %arg7[%90, %c0_26] : memref<72x256xf32, #tpu.memory_space<vmem>>, vector<8x256xf32>
    %92 = arith.addf %89, %91 : vector<8x256xf32>
    %93 = arith.negf %92 : vector<8x256xf32>
    %94 = math.exp %93 : vector<8x256xf32>
    %cst_27 = arith.constant 1.000000e+00 : f32
    %95 = vector.broadcast %cst_27 : f32 to vector<8x256xf32>
    %96 = arith.addf %95, %94 : vector<8x256xf32>
    %97 = arith.divf %95, %96 : vector<8x256xf32>
    %98 = math.tanh %92 : vector<8x256xf32>
    %99 = vector.extract_strided_slice %97 {offsets = [0, 64], sizes = [8, 64], strides = [1, 1]} : vector<8x256xf32> to vector<8x64xf32>
    %100 = arith.mulf %99, %83 : vector<8x64xf32>
    %101 = vector.extract_strided_slice %97 {offsets = [0, 0], sizes = [8, 64], strides = [1, 1]} : vector<8x256xf32> to vector<8x64xf32>
    %102 = vector.extract_strided_slice %98 {offsets = [0, 128], sizes = [8, 64], strides = [1, 1]} : vector<8x256xf32> to vector<8x64xf32>
    %103 = arith.mulf %101, %102 : vector<8x64xf32>
    %104 = arith.addf %100, %103 : vector<8x64xf32>
    %105 = vector.extract_strided_slice %97 {offsets = [0, 192], sizes = [8, 64], strides = [1, 1]} : vector<8x256xf32> to vector<8x64xf32>
    %106 = math.tanh %104 : vector<8x64xf32>
    %107 = arith.mulf %105, %106 : vector<8x64xf32>
    %c5_i32 = arith.constant 5 : i32
    %c8_i32_28 = arith.constant 8 : i32
    %108 = arith.muli %c5_i32, %c8_i32_28 : i32
    %109 = tpu.assume_multiple %108, 8 : i32
    %cst_29 = arith.constant dense<0.000000e+00> : vector<8x256xf32>
    %110 = tpu.matmul %107, %0, %cst_29 {dimension_numbers = #tpu.dot_dimension_numbers<[1], [0], [0], [1], [0, 0, 1, 1], [], []>} : vector<8x64xf32>, vector<64x256xf32>, vector<8x256xf32> -> vector<8x256xf32>
    %111 = arith.index_cast %109 : i32 to index
    %c0_30 = arith.constant 0 : index
    %112 = vector.load %arg7[%111, %c0_30] : memref<72x256xf32, #tpu.memory_space<vmem>>, vector<8x256xf32>
    %113 = arith.addf %110, %112 : vector<8x256xf32>
    %114 = arith.negf %113 : vector<8x256xf32>
    %115 = math.exp %114 : vector<8x256xf32>
    %cst_31 = arith.constant 1.000000e+00 : f32
    %116 = vector.broadcast %cst_31 : f32 to vector<8x256xf32>
    %117 = arith.addf %116, %115 : vector<8x256xf32>
    %118 = arith.divf %116, %117 : vector<8x256xf32>
    %119 = math.tanh %113 : vector<8x256xf32>
    %120 = vector.extract_strided_slice %118 {offsets = [0, 64], sizes = [8, 64], strides = [1, 1]} : vector<8x256xf32> to vector<8x64xf32>
    %121 = arith.mulf %120, %104 : vector<8x64xf32>
    %122 = vector.extract_strided_slice %118 {offsets = [0, 0], sizes = [8, 64], strides = [1, 1]} : vector<8x256xf32> to vector<8x64xf32>
    %123 = vector.extract_strided_slice %119 {offsets = [0, 128], sizes = [8, 64], strides = [1, 1]} : vector<8x256xf32> to vector<8x64xf32>
    %124 = arith.mulf %122, %123 : vector<8x64xf32>
    %125 = arith.addf %121, %124 : vector<8x64xf32>
    %126 = vector.extract_strided_slice %118 {offsets = [0, 192], sizes = [8, 64], strides = [1, 1]} : vector<8x256xf32> to vector<8x64xf32>
    %127 = math.tanh %125 : vector<8x64xf32>
    %128 = arith.mulf %126, %127 : vector<8x64xf32>
    %c6_i32 = arith.constant 6 : i32
    %c8_i32_32 = arith.constant 8 : i32
    %129 = arith.muli %c6_i32, %c8_i32_32 : i32
    %130 = tpu.assume_multiple %129, 8 : i32
    %cst_33 = arith.constant dense<0.000000e+00> : vector<8x256xf32>
    %131 = tpu.matmul %128, %0, %cst_33 {dimension_numbers = #tpu.dot_dimension_numbers<[1], [0], [0], [1], [0, 0, 1, 1], [], []>} : vector<8x64xf32>, vector<64x256xf32>, vector<8x256xf32> -> vector<8x256xf32>
    %132 = arith.index_cast %130 : i32 to index
    %c0_34 = arith.constant 0 : index
    %133 = vector.load %arg7[%132, %c0_34] : memref<72x256xf32, #tpu.memory_space<vmem>>, vector<8x256xf32>
    %134 = arith.addf %131, %133 : vector<8x256xf32>
    %135 = arith.negf %134 : vector<8x256xf32>
    %136 = math.exp %135 : vector<8x256xf32>
    %cst_35 = arith.constant 1.000000e+00 : f32
    %137 = vector.broadcast %cst_35 : f32 to vector<8x256xf32>
    %138 = arith.addf %137, %136 : vector<8x256xf32>
    %139 = arith.divf %137, %138 : vector<8x256xf32>
    %140 = math.tanh %134 : vector<8x256xf32>
    %141 = vector.extract_strided_slice %139 {offsets = [0, 64], sizes = [8, 64], strides = [1, 1]} : vector<8x256xf32> to vector<8x64xf32>
    %142 = arith.mulf %141, %125 : vector<8x64xf32>
    %143 = vector.extract_strided_slice %139 {offsets = [0, 0], sizes = [8, 64], strides = [1, 1]} : vector<8x256xf32> to vector<8x64xf32>
    %144 = vector.extract_strided_slice %140 {offsets = [0, 128], sizes = [8, 64], strides = [1, 1]} : vector<8x256xf32> to vector<8x64xf32>
    %145 = arith.mulf %143, %144 : vector<8x64xf32>
    %146 = arith.addf %142, %145 : vector<8x64xf32>
    %147 = vector.extract_strided_slice %139 {offsets = [0, 192], sizes = [8, 64], strides = [1, 1]} : vector<8x256xf32> to vector<8x64xf32>
    %148 = math.tanh %146 : vector<8x64xf32>
    %149 = arith.mulf %147, %148 : vector<8x64xf32>
    %c7_i32 = arith.constant 7 : i32
    %c8_i32_36 = arith.constant 8 : i32
    %150 = arith.muli %c7_i32, %c8_i32_36 : i32
    %151 = tpu.assume_multiple %150, 8 : i32
    %cst_37 = arith.constant dense<0.000000e+00> : vector<8x256xf32>
    %152 = tpu.matmul %149, %0, %cst_37 {dimension_numbers = #tpu.dot_dimension_numbers<[1], [0], [0], [1], [0, 0, 1, 1], [], []>} : vector<8x64xf32>, vector<64x256xf32>, vector<8x256xf32> -> vector<8x256xf32>
    %153 = arith.index_cast %151 : i32 to index
    %c0_38 = arith.constant 0 : index
    %154 = vector.load %arg7[%153, %c0_38] : memref<72x256xf32, #tpu.memory_space<vmem>>, vector<8x256xf32>
    %155 = arith.addf %152, %154 : vector<8x256xf32>
    %156 = arith.negf %155 : vector<8x256xf32>
    %157 = math.exp %156 : vector<8x256xf32>
    %cst_39 = arith.constant 1.000000e+00 : f32
    %158 = vector.broadcast %cst_39 : f32 to vector<8x256xf32>
    %159 = arith.addf %158, %157 : vector<8x256xf32>
    %160 = arith.divf %158, %159 : vector<8x256xf32>
    %161 = math.tanh %155 : vector<8x256xf32>
    %162 = vector.extract_strided_slice %160 {offsets = [0, 64], sizes = [8, 64], strides = [1, 1]} : vector<8x256xf32> to vector<8x64xf32>
    %163 = arith.mulf %162, %146 : vector<8x64xf32>
    %164 = vector.extract_strided_slice %160 {offsets = [0, 0], sizes = [8, 64], strides = [1, 1]} : vector<8x256xf32> to vector<8x64xf32>
    %165 = vector.extract_strided_slice %161 {offsets = [0, 128], sizes = [8, 64], strides = [1, 1]} : vector<8x256xf32> to vector<8x64xf32>
    %166 = arith.mulf %164, %165 : vector<8x64xf32>
    %167 = arith.addf %163, %166 : vector<8x64xf32>
    %168 = vector.extract_strided_slice %160 {offsets = [0, 192], sizes = [8, 64], strides = [1, 1]} : vector<8x256xf32> to vector<8x64xf32>
    %169 = math.tanh %167 : vector<8x64xf32>
    %170 = arith.mulf %168, %169 : vector<8x64xf32>
    %c8_i32_40 = arith.constant 8 : i32
    %c8_i32_41 = arith.constant 8 : i32
    %171 = arith.muli %c8_i32_40, %c8_i32_41 : i32
    %172 = tpu.assume_multiple %171, 8 : i32
    %cst_42 = arith.constant dense<0.000000e+00> : vector<8x256xf32>
    %173 = tpu.matmul %170, %0, %cst_42 {dimension_numbers = #tpu.dot_dimension_numbers<[1], [0], [0], [1], [0, 0, 1, 1], [], []>} : vector<8x64xf32>, vector<64x256xf32>, vector<8x256xf32> -> vector<8x256xf32>
    %174 = arith.index_cast %172 : i32 to index
    %c0_43 = arith.constant 0 : index
    %175 = vector.load %arg7[%174, %c0_43] : memref<72x256xf32, #tpu.memory_space<vmem>>, vector<8x256xf32>
    %176 = arith.addf %173, %175 : vector<8x256xf32>
    %177 = arith.negf %176 : vector<8x256xf32>
    %178 = math.exp %177 : vector<8x256xf32>
    %cst_44 = arith.constant 1.000000e+00 : f32
    %179 = vector.broadcast %cst_44 : f32 to vector<8x256xf32>
    %180 = arith.addf %179, %178 : vector<8x256xf32>
    %181 = arith.divf %179, %180 : vector<8x256xf32>
    %182 = math.tanh %176 : vector<8x256xf32>
    %183 = vector.extract_strided_slice %181 {offsets = [0, 64], sizes = [8, 64], strides = [1, 1]} : vector<8x256xf32> to vector<8x64xf32>
    %184 = arith.mulf %183, %167 : vector<8x64xf32>
    %185 = vector.extract_strided_slice %181 {offsets = [0, 0], sizes = [8, 64], strides = [1, 1]} : vector<8x256xf32> to vector<8x64xf32>
    %186 = vector.extract_strided_slice %182 {offsets = [0, 128], sizes = [8, 64], strides = [1, 1]} : vector<8x256xf32> to vector<8x64xf32>
    %187 = arith.mulf %185, %186 : vector<8x64xf32>
    %188 = arith.addf %184, %187 : vector<8x64xf32>
    %189 = vector.extract_strided_slice %181 {offsets = [0, 192], sizes = [8, 64], strides = [1, 1]} : vector<8x256xf32> to vector<8x64xf32>
    %190 = math.tanh %188 : vector<8x64xf32>
    %191 = arith.mulf %189, %190 : vector<8x64xf32>
    %c8_i32_45 = arith.constant 8 : i32
    %c0_46 = arith.constant 0 : index
    %c0_47 = arith.constant 0 : index
    %192 = vector.load %arg4[%c0_46, %c0_47] : memref<64x128xf32, #tpu.memory_space<vmem>>, vector<64x128xf32>
    %cst_48 = arith.constant dense<0.000000e+00> : vector<8x128xf32>
    %193 = tpu.matmul %191, %192, %cst_48 {dimension_numbers = #tpu.dot_dimension_numbers<[1], [0], [0], [1], [0, 0, 1, 1], [], []>} : vector<8x64xf32>, vector<64x128xf32>, vector<8x128xf32> -> vector<8x128xf32>
    %c0_49 = arith.constant 0 : index
    %c0_50 = arith.constant 0 : index
    %194 = vector.load %arg5[%c0_49, %c0_50] : memref<1x128xf32, #tpu.memory_space<vmem>>, vector<1x128xf32>
    %195 = vector.broadcast %194 : vector<1x128xf32> to vector<8x128xf32>
    %196 = arith.addf %193, %195 : vector<8x128xf32>
    %c0_51 = arith.constant 0 : index
    %c0_52 = arith.constant 0 : index
    %197 = vector.load %arg6[%c0_51, %c0_52] : memref<8x128xf32, #tpu.memory_space<vmem>>, vector<8x128xf32>
    tpu.vector_store %arg6[%c0_51, %c0_52], %196 {strides = array<i32>} : memref<8x128xf32, #tpu.memory_space<vmem>>, vector<8x128xf32>,
    return
  }
}

</mosaic_0001>

<llo_original>
// kernel: rnn_model_forward.1
$region0: #{rnn_model_forward.1}
  #allocation0 [shape = 'u32[]', space=smem, size = 0x4, offset = 0x4, fixed_abs, tag = 'smem constant byte address 0x4 - core index']
  #allocation1 [shape = 'u32[144,128]{1,0:T(1,128)}', space=vmem, size = 0x12000, scoped, tag = 'internal scratch']
  #allocation2 [shape = 'f32[72,256]{1,0:T(8,128)}', space=vmem, size = 0x12000, scoped, tag = 'scratch operand']
  %s0 = inlined_call_operand.vmem [shape: f32[72,8], index: 0, kind: input, shape index: {}]
  %s1 = inlined_call_operand.hbm [shape: f32[8,256], index: 1, kind: input, shape index: {}]
  %s2 = inlined_call_operand.vmem [shape: f32[1,256], index: 2, kind: input, shape index: {}]
  %s3 = inlined_call_operand.vmem [shape: f32[64,256], index: 3, kind: input, shape index: {}]
  %s4 = inlined_call_operand.hbm [shape: f32[64,128], index: 4, kind: input, shape index: {}]
  %s5 = inlined_call_operand.vmem [shape: f32[1,128], index: 5, kind: input, shape index: {}]
  %s6 = inlined_call_operand.vmem [shape: f32[8,128], index: 6, kind: output, shape index: {}]
  %s7 = sld [smem:[#allocation0]]
  $region42: #{rnn_model_forward.1} parent=0
    _
  %s9 = ssub.s32 1, %s7
  %s10 = scalar_select 0, %s9, %s7
  $region1: #{rnn_model_forward.1} parent=0
    #allocation3 [shape = 'u8[8192]{0}', space=vmem, size = 0x2000, scoped, tag = 'input window, operand 1, single buffered']
    #allocation4 [shape = 's32[1]{0}', space=sflag, size = 0x4, scoped, tag = 'scoped memory for rnn_model_forward.1']
    #allocation5 [shape = 'u8[32768]{0}', space=vmem, size = 0x8000, scoped, tag = 'input window, operand 4, single buffered']
    #allocation6 [shape = 's32[1]{0}', space=sflag, size = 0x4, scoped, tag = 'scoped memory for rnn_model_forward.1']
    %11 = vsyncpa [#allocation4], 0
    %12 = vsyncpa [#allocation6], 0
    // Predicated region
    $region2: #{rnn_model_forward.1} parent=1 // pred_check
      _
    $region3: #{rnn_model_forward.1} parent=1 // pred_check_branch
      %14 = sbr.rel (0) target = $region5
    $region4: #{rnn_model_forward.1} parent=1 // pred_region
      _
    $region5: #{rnn_model_forward.1} parent=1 // pred_fallthru
      _
    // Predicated region
    $region6: #{rnn_model_forward.1} parent=1 // pred_check
      _
    $region7: #{rnn_model_forward.1} parent=1 // pred_check_branch
      %16 = sbr.rel (0) target = $region9
    $region8: #{rnn_model_forward.1} parent=1 // pred_region
      %s18 = ssub.s32 256, 256
      %19 = vsyncadd [#allocation4], %s18
      %s21 = sshll.u32 [#allocation3], 4
      %s22 = int_to_ptr.vmem [resolvable:$true] %s21
      %24 = dma.hbm_to_vmem [thread:$0]  %s1, 256, %s22, [#allocation4]
    $region9: #{rnn_model_forward.1} parent=1 // pred_fallthru
      _
    // Predicated region
    $region10: #{rnn_model_forward.1} parent=1 // pred_check
      _
    $region11: #{rnn_model_forward.1} parent=1 // pred_check_branch
      %26 = sbr.rel (0) target = $region13
    $region12: #{rnn_model_forward.1} parent=1 // pred_region
      _
    $region13: #{rnn_model_forward.1} parent=1 // pred_fallthru
      _
    // Predicated region
    $region14: #{rnn_model_forward.1} parent=1 // pred_check
      _
    $region15: #{rnn_model_forward.1} parent=1 // pred_check_branch
      %28 = sbr.rel (0) target = $region17
    $region16: #{rnn_model_forward.1} parent=1 // pred_region
      _
    $region17: #{rnn_model_forward.1} parent=1 // pred_fallthru
      _
    // Predicated region
    $region18: #{rnn_model_forward.1} parent=1 // pred_check
      _
    $region19: #{rnn_model_forward.1} parent=1 // pred_check_branch
      %30 = sbr.rel (0) target = $region21
    $region20: #{rnn_model_forward.1} parent=1 // pred_region
      %s32 = ssub.s32 1024, 1024
      %33 = vsyncadd [#allocation6], %s32
      %s34 = sshll.u32 [#allocation5], 4
      %s35 = int_to_ptr.vmem [resolvable:$true] %s34
      %40 = dma.hbm_to_vmem [thread:$0]  %s4, 1024, %s35, [#allocation6], 128, 128, 8
    $region21: #{rnn_model_forward.1} parent=1 // pred_fallthru
      _
    // Predicated region
    $region22: #{rnn_model_forward.1} parent=1 // pred_check
      _
    $region23: #{rnn_model_forward.1} parent=1 // pred_check_branch
      %42 = sbr.rel (0) target = $region25
    $region24: #{rnn_model_forward.1} parent=1 // pred_region
      _
    $region25: #{rnn_model_forward.1} parent=1 // pred_fallthru
      _
    // Predicated region
    $region26: #{rnn_model_forward.1} parent=1 // pred_check
      _
    $region27: #{rnn_model_forward.1} parent=1 // pred_check_branch
      %44 = sbr.rel (0) target = $region29
    $region28: #{rnn_model_forward.1} parent=1 // pred_region
      %45 = dma.done [#allocation4], 256
    $region29: #{rnn_model_forward.1} parent=1 // pred_fallthru
      _
    // Predicated region
    $region30: #{rnn_model_forward.1} parent=1 // pred_check
      _
    $region31: #{rnn_model_forward.1} parent=1 // pred_check_branch
      %47 = sbr.rel (0) target = $region33
    $region32: #{rnn_model_forward.1} parent=1 // pred_region
      %48 = dma.done [#allocation6], 1024
    $region33: #{rnn_model_forward.1} parent=1 // pred_fallthru
      _
    %v49 = vld [vmem:[%s3] sm:$0xff]
    %v50 = vld [vmem:[%s3 + $0x8] sm:$0xff]
    %v51 = vld [vmem:[%s3 + $0x10] sm:$0xff]
    %v52 = vld [vmem:[%s3 + $0x18] sm:$0xff]
    %v53 = vld [vmem:[%s3 + $0x20] sm:$0xff]
    %v54 = vld [vmem:[%s3 + $0x28] sm:$0xff]
    %v55 = vld [vmem:[%s3 + $0x30] sm:$0xff]
    %v56 = vld [vmem:[%s3 + $0x38] sm:$0xff]
    %v57 = vld [vmem:[%s3 + $0x40] sm:$0xff]
    %v58 = vld [vmem:[%s3 + $0x48] sm:$0xff]
    %v59 = vld [vmem:[%s3 + $0x50] sm:$0xff]
    %v60 = vld [vmem:[%s3 + $0x58] sm:$0xff]
    %v61 = vld [vmem:[%s3 + $0x60] sm:$0xff]
    %v62 = vld [vmem:[%s3 + $0x68] sm:$0xff]
    %v63 = vld [vmem:[%s3 + $0x70] sm:$0xff]
    %v64 = vld [vmem:[%s3 + $0x78] sm:$0xff]
    %v65 = vld [vmem:[%s0] sm:$0xff]
    %v66 = vld [vmem:[%s0 + $0x8] sm:$0xff]
    %v67 = vld [vmem:[%s0 + $0x10] sm:$0xff]
    %v68 = vld [vmem:[%s0 + $0x18] sm:$0xff]
    %v69 = vld [vmem:[%s0 + $0x20] sm:$0xff]
    %v70 = vld [vmem:[%s0 + $0x28] sm:$0xff]
    %v71 = vld [vmem:[%s0 + $0x30] sm:$0xff]
    %v72 = vld [vmem:[%s0 + $0x38] sm:$0xff]
    %v73 = vld [vmem:[%s0 + $0x40] sm:$0xff]
    %v74 = vld [vmem:[#allocation3] sm:$0xff]
    %v75 = vld [vmem:[#allocation3 + $0x8] sm:$0xff]
    %v76 = vld [vmem:[%s2] sm:$0x3]
    %v78 = vlaneseq
    %v79 = vshrl.u32 %v78, 7
    %v80 = vsub.s32 0, %v79
    %v81 = vrot.slane %v76, %v80
    %v82 = vlaneseq
    %v83 = vshrl.u32 %v82, 7
    %v84 = vsub.s32 1, %v83
    %v85 = vrot.slane %v76, %v84
    %vm88 = vcmask 64512
    %v90 = vsel %vm88, %v65, 0
    %v93 = vsel %vm88, %v66, 0
    %v96 = vsel %vm88, %v67, 0
    %v99 = vsel %vm88, %v68, 0
    %v102 = vsel %vm88, %v69, 0
    %v105 = vsel %vm88, %v70, 0
    %v108 = vsel %vm88, %v71, 0
    %v111 = vsel %vm88, %v72, 0
    %v114 = vsel %vm88, %v73, 0
    %116 = vmatprep.subr.mxu0 %v75
    %117 = vmatpush1.msra.mxu0 %v74
    %118 = vmatprep.subr.mxu0 0.0
    %119 = vmatpush1.msra.mxu0 0.0
    %120 = vmatprep.subr.mxu0 0.0
    %121 = vmatpush1.msra.mxu0 0.0
    %122 = vmatprep.subr.mxu0 0.0
    %123 = vmatpush1.msra.mxu0 0.0
    %124 = vmatprep.subr.mxu0 0.0
    %125 = vmatpush1.msra.mxu0 0.0
    %126 = vmatprep.subr.mxu0 0.0
    %127 = vmatpush1.msra.mxu0 0.0
    %128 = vmatprep.subr.mxu0 0.0
    %129 = vmatpush1.msra.mxu0 0.0
    %130 = vmatprep.subr.mxu0 0.0
    %131 = vmatpush1.msra.mxu0 0.0
    %132 = vmatprep.subr.mxu0 0.0
    %133 = vmatpush1.msra.mxu0 0.0
    %134 = vmatprep.subr.mxu0 0.0
    %135 = vmatpush1.msra.mxu0 0.0
    %136 = vmatprep.subr.mxu0 0.0
    %137 = vmatpush1.msra.mxu0 0.0
    %138 = vmatprep.subr.mxu0 0.0
    %139 = vmatpush1.msra.mxu0 0.0
    %140 = vmatprep.subr.mxu0 0.0
    %141 = vmatpush1.msra.mxu0 0.0
    %142 = vmatprep.subr.mxu0 0.0
    %143 = vmatpush1.msra.mxu0 0.0
    %144 = vmatprep.subr.mxu0 0.0
    %145 = vmatpush1.msra.mxu0 0.0
    %146 = vmatprep.subr.mxu0 0.0
    %147 = vmatpush1.msra.mxu0 0.0
    %148 = vmatprep.subr.mxu0 0.0
    %149 = vmatpush1.msra.mxu0 0.0
    %150 = vmatprep.subr.mxu0 0.0
    %151 = vmatpush1.msra.mxu0 0.0
    %152 = vmatprep.subr.mxu0 0.0
    %153 = vmatpush1.msra.mxu0 0.0
    %154 = vmatprep.subr.mxu0 0.0
    %155 = vmatpush1.msra.mxu0 0.0
    %156 = vmatprep.subr.mxu0 0.0
    %157 = vmatpush1.msra.mxu0 0.0
    %158 = vmatprep.subr.mxu0 0.0
    %159 = vmatpush1.msra.mxu0 0.0
    %160 = vmatprep.subr.mxu0 0.0
    %161 = vmatpush1.msra.mxu0 0.0
    %162 = vmatprep.subr.mxu0 0.0
    %163 = vmatpush1.msra.mxu0 0.0
    %164 = vmatprep.subr.mxu0 0.0
    %165 = vmatpush1.msra.mxu0 0.0
    %166 = vmatprep.subr.mxu0 0.0
    %167 = vmatpush1.msra.mxu0 0.0
    %168 = vmatprep.subr.mxu0 0.0
    %169 = vmatpush1.msra.mxu0 0.0
    %170 = vmatprep.subr.mxu0 0.0
    %171 = vmatpush1.msra.mxu0 0.0
    %172 = vmatprep.subr.mxu0 0.0
    %173 = vmatpush1.msra.mxu0 0.0
    %174 = vmatprep.subr.mxu0 0.0
    %175 = vmatpush1.msra.mxu0 0.0
    %176 = vmatprep.subr.mxu0 0.0
    %177 = vmatpush1.msra.mxu0 0.0
    %178 = vmatprep.subr.mxu0 0.0
    %179 = vmatpush1.msra.mxu0 0.0
    %180 = vmatprep.mubr.f32.mxu0 0.0
    %181 = vmatmul.mubr.f32.gmra.mrb[0].mxu0 %v90
    %v182 = vpop.f32.mrb[0].mxu0
    %v183 = vadd.f32 %v81, %v182
    %v184 = vpop.f32.mrb[0].mxu0
    %v185 = vadd.f32 %v85, %v184
    %186 = vmatprep.mubr.f32.mxu0 0.0
    %187 = vmatmul.mubr.f32.gmra.mrb[0].mxu0 %v93
    %v188 = vpop.f32.mrb[0].mxu0
    %v189 = vadd.f32 %v81, %v188
    %v190 = vpop.f32.mrb[0].mxu0
    %v191 = vadd.f32 %v85, %v190
    %192 = vmatprep.mubr.f32.mxu0 0.0
    %193 = vmatmul.mubr.f32.gmra.mrb[0].mxu0 %v96
    %v194 = vpop.f32.mrb[0].mxu0
    %v195 = vadd.f32 %v81, %v194
    %v196 = vpop.f32.mrb[0].mxu0
    %v197 = vadd.f32 %v85, %v196
    %198 = vmatprep.mubr.f32.mxu0 0.0
    %199 = vmatmul.mubr.f32.gmra.mrb[0].mxu0 %v99
    %v200 = vpop.f32.mrb[0].mxu0
    %v201 = vadd.f32 %v81, %v200
    %v202 = vpop.f32.mrb[0].mxu0
    %v203 = vadd.f32 %v85, %v202
    %204 = vmatprep.mubr.f32.mxu0 0.0
    %205 = vmatmul.mubr.f32.gmra.mrb[0].mxu0 %v102
    %v206 = vpop.f32.mrb[0].mxu0
    %v207 = vadd.f32 %v81, %v206
    %v208 = vpop.f32.mrb[0].mxu0
    %v209 = vadd.f32 %v85, %v208
    %210 = vmatprep.mubr.f32.mxu0 0.0
    %211 = vmatmul.mubr.f32.gmra.mrb[0].mxu0 %v105
    %v212 = vpop.f32.mrb[0].mxu0
    %v213 = vadd.f32 %v81, %v212
    %v214 = vpop.f32.mrb[0].mxu0
    %v215 = vadd.f32 %v85, %v214
    %216 = vmatprep.mubr.f32.mxu0 0.0
    %217 = vmatmul.mubr.f32.gmra.mrb[0].mxu0 %v108
    %v218 = vpop.f32.mrb[0].mxu0
    %v219 = vadd.f32 %v81, %v218
    %v220 = vpop.f32.mrb[0].mxu0
    %v221 = vadd.f32 %v85, %v220
    %222 = vmatprep.mubr.f32.mxu0 0.0
    %223 = vmatmul.mubr.f32.gmra.mrb[0].mxu0 %v111
    %v224 = vpop.f32.mrb[0].mxu0
    %v225 = vadd.f32 %v81, %v224
    %v226 = vpop.f32.mrb[0].mxu0
    %v227 = vadd.f32 %v85, %v226
    %228 = vmatprep.mubr.f32.mxu0 0.0
    %229 = vmatmul.mubr.f32.gmra.mrb[0].mxu0 %v114
    %v230 = vpop.f32.mrb[0].mxu0
    %v231 = vadd.f32 %v81, %v230
    %v232 = vpop.f32.mrb[0].mxu0
    %v233 = vadd.f32 %v85, %v232
    %234 = vdwg.mxu0
    %235 = vst [vmem:[#allocation2] sm:$0xff] %v183
    %236 = vst [vmem:[#allocation2 + $0x8] sm:$0xff] %v185
    %237 = vst [vmem:[#allocation2 + $0x10] sm:$0xff] %v189
    %238 = vst [vmem:[#allocation2 + $0x18] sm:$0xff] %v191
    %239 = vst [vmem:[#allocation2 + $0x20] sm:$0xff] %v195
    %240 = vst [vmem:[#allocation2 + $0x28] sm:$0xff] %v197
    %241 = vst [vmem:[#allocation2 + $0x30] sm:$0xff] %v201
    %242 = vst [vmem:[#allocation2 + $0x38] sm:$0xff] %v203
    %243 = vst [vmem:[#allocation2 + $0x40] sm:$0xff] %v207
    %244 = vst [vmem:[#allocation2 + $0x48] sm:$0xff] %v209
    %245 = vst [vmem:[#allocation2 + $0x50] sm:$0xff] %v213
    %246 = vst [vmem:[#allocation2 + $0x58] sm:$0xff] %v215
    %247 = vst [vmem:[#allocation2 + $0x60] sm:$0xff] %v219
    %248 = vst [vmem:[#allocation2 + $0x68] sm:$0xff] %v221
    %249 = vst [vmem:[#allocation2 + $0x70] sm:$0xff] %v225
    %250 = vst [vmem:[#allocation2 + $0x78] sm:$0xff] %v227
    %251 = vst [vmem:[#allocation2 + $0x80] sm:$0xff] %v231
    %252 = vst [vmem:[#allocation2 + $0x88] sm:$0xff] %v233
    %v253 = vld [vmem:[#allocation2] sm:$0xff]
    %v254 = vld [vmem:[#allocation2 + $0x8] sm:$0xff]
    %v255 = vxor.u32 %v253, 2147483648
    %v256 = vxor.u32 %v254, 2147483648
    %v257 = vmul.f32 %v255, 1.442695
    %v258 = vpow.pop %v257
    %v259 = vmul.f32 %v256, 1.442695
    %v260 = vpow.pop %v259
    %v261 = vadd.f32 %v258, 1.0
    %v262 = vadd.f32 %v260, 1.0
    %v263 = vrcp.pop %v261
    %v264 = vmul.f32 1.0, %v263
    %v265 = vrcp.pop %v262
    %v266 = vmul.f32 1.0, %v265
    %v267 = vtanh.pop %v254
    %v268 = vmul.f32 %v264, %v267
    %v269 = vtanh.pop %v268
    %271 = vrot.lane.b32.xlu0 %v269, 64
    %v272 = vpop.permute.xlu0 %271
    %v274 = vmul.f32 %v266, %v272
    %276 = vrot.lane.b32.xlu0 %v274, 64
    %v277 = vpop.permute.xlu0 %276
    %vm279 = vcmask 261120
    %v280 = vsel %vm279, %v277, 0.0
    %v281 = vsel %vm279, %v268, 0.0
    %s282 = smul.u32 1, 2
    %s283 = smul.addr %s282, 8
    %s284 = scalar_lea.vmem [#allocation2], %s283
    %v285 = vld [vmem:[%s284] sm:$0xff]
    %v286 = vld [vmem:[%s284 + $0x8] sm:$0xff]
    %vm287 = vcmask 523264
    %v289 = vsel %vm287, %v280, 0
    %291 = vmatprep.subr.mxu0 %v50
    %292 = vmatpush1.msra.mxu0 %v49
    %293 = vmatprep.subr.mxu0 %v52
    %294 = vmatpush1.msra.mxu0 %v51
    %295 = vmatprep.subr.mxu0 %v54
    %296 = vmatpush1.msra.mxu0 %v53
    %297 = vmatprep.subr.mxu0 %v56
    %298 = vmatpush1.msra.mxu0 %v55
    %299 = vmatprep.subr.mxu0 %v58
    %300 = vmatpush1.msra.mxu0 %v57
    %301 = vmatprep.subr.mxu0 %v60
    %302 = vmatpush1.msra.mxu0 %v59
    %303 = vmatprep.subr.mxu0 %v62
    %304 = vmatpush1.msra.mxu0 %v61
    %305 = vmatprep.subr.mxu0 %v64
    %306 = vmatpush1.msra.mxu0 %v63
    %307 = vmatprep.subr.mxu0 0.0
    %308 = vmatpush1.msra.mxu0 0.0
    %309 = vmatprep.subr.mxu0 0.0
    %310 = vmatpush1.msra.mxu0 0.0
    %311 = vmatprep.subr.mxu0 0.0
    %312 = vmatpush1.msra.mxu0 0.0
    %313 = vmatprep.subr.mxu0 0.0
    %314 = vmatpush1.msra.mxu0 0.0
    %315 = vmatprep.subr.mxu0 0.0
    %316 = vmatpush1.msra.mxu0 0.0
    %317 = vmatprep.subr.mxu0 0.0
    %318 = vmatpush1.msra.mxu0 0.0
    %319 = vmatprep.subr.mxu0 0.0
    %320 = vmatpush1.msra.mxu0 0.0
    %321 = vmatprep.subr.mxu0 0.0
    %322 = vmatpush1.msra.mxu0 0.0
    %323 = vmatprep.subr.mxu0 0.0
    %324 = vmatpush1.msra.mxu0 0.0
    %325 = vmatprep.subr.mxu0 0.0
    %326 = vmatpush1.msra.mxu0 0.0
    %327 = vmatprep.subr.mxu0 0.0
    %328 = vmatpush1.msra.mxu0 0.0
    %329 = vmatprep.subr.mxu0 0.0
    %330 = vmatpush1.msra.mxu0 0.0
    %331 = vmatprep.subr.mxu0 0.0
    %332 = vmatpush1.msra.mxu0 0.0
    %333 = vmatprep.subr.mxu0 0.0
    %334 = vmatpush1.msra.mxu0 0.0
    %335 = vmatprep.subr.mxu0 0.0
    %336 = vmatpush1.msra.mxu0 0.0
    %337 = vmatprep.subr.mxu0 0.0
    %338 = vmatpush1.msra.mxu0 0.0
    %339 = vmatprep.subr.mxu0 0.0
    %340 = vmatpush1.msra.mxu0 0.0
    %341 = vmatprep.subr.mxu0 0.0
    %342 = vmatpush1.msra.mxu0 0.0
    %343 = vmatprep.subr.mxu0 0.0
    %344 = vmatpush1.msra.mxu0 0.0
    %345 = vmatprep.subr.mxu0 0.0
    %346 = vmatpush1.msra.mxu0 0.0
    %347 = vmatprep.subr.mxu0 0.0
    %348 = vmatpush1.msra.mxu0 0.0
    %349 = vmatprep.subr.mxu0 0.0
    %350 = vmatpush1.msra.mxu0 0.0
    %351 = vmatprep.subr.mxu0 0.0
    %352 = vmatpush1.msra.mxu0 0.0
    %353 = vmatprep.subr.mxu0 0.0
    %354 = vmatpush1.msra.mxu0 0.0
    %355 = vmatprep.mubr.f32.mxu0 0.0
    %356 = vmatmul.mubr.f32.gmra.mrb[0].mxu0 %v289
    %v357 = vpop.f32.mrb[0].mxu0
    %v358 = vadd.f32 %v285, %v357
    %v359 = vpop.f32.mrb[0].mxu0
    %v360 = vadd.f32 %v286, %v359
    %361 = vdwg.mxu0
    %v362 = vxor.u32 %v358, 2147483648
    %v363 = vxor.u32 %v360, 2147483648
    %v364 = vmul.f32 %v362, 1.442695
    %v365 = vpow.pop %v364
    %v366 = vmul.f32 %v363, 1.442695
    %v367 = vpow.pop %v366
    %v368 = vadd.f32 %v365, 1.0
    %v369 = vadd.f32 %v367, 1.0
    %v370 = vrcp.pop %v368
    %v371 = vmul.f32 1.0, %v370
    %v372 = vrcp.pop %v369
    %v373 = vmul.f32 1.0, %v372
    %v374 = vtanh.pop %v360
    %376 = vrot.lane.b32.xlu0 %v281, 64
    %v377 = vpop.permute.xlu0 %376
    %v379 = vmul.f32 %v371, %v377
    %v380 = vmul.f32 %v371, %v374
    %382 = vrot.lane.b32.xlu0 %v380, 64
    %v383 = vpop.permute.xlu0 %382
    %v385 = vadd.f32 %v379, %v383
    %v386 = vtanh.pop %v385
    %v387 = vmul.f32 %v373, %v386
    %s388 = smul.u32 2, 2
    %s389 = smul.addr %s388, 8
    %s390 = scalar_lea.vmem [#allocation2], %s389
    %v391 = vld [vmem:[%s390] sm:$0xff]
    %v392 = vld [vmem:[%s390 + $0x8] sm:$0xff]
    %394 = vrot.lane.b32.xlu0 %v387, 64
    %v395 = vpop.permute.xlu0 %394
    %v396 = vsel %vm287, %v395, 0
    %398 = vmatprep.subr.mxu0 %v50
    %399 = vmatpush1.msra.mxu0 %v49
    %400 = vmatprep.subr.mxu0 %v52
    %401 = vmatpush1.msra.mxu0 %v51
    %402 = vmatprep.subr.mxu0 %v54
    %403 = vmatpush1.msra.mxu0 %v53
    %404 = vmatprep.subr.mxu0 %v56
    %405 = vmatpush1.msra.mxu0 %v55
    %406 = vmatprep.subr.mxu0 %v58
    %407 = vmatpush1.msra.mxu0 %v57
    %408 = vmatprep.subr.mxu0 %v60
    %409 = vmatpush1.msra.mxu0 %v59
    %410 = vmatprep.subr.mxu0 %v62
    %411 = vmatpush1.msra.mxu0 %v61
    %412 = vmatprep.subr.mxu0 %v64
    %413 = vmatpush1.msra.mxu0 %v63
    %414 = vmatprep.subr.mxu0 0.0
    %415 = vmatpush1.msra.mxu0 0.0
    %416 = vmatprep.subr.mxu0 0.0
    %417 = vmatpush1.msra.mxu0 0.0
    %418 = vmatprep.subr.mxu0 0.0
    %419 = vmatpush1.msra.mxu0 0.0
    %420 = vmatprep.subr.mxu0 0.0
    %421 = vmatpush1.msra.mxu0 0.0
    %422 = vmatprep.subr.mxu0 0.0
    %423 = vmatpush1.msra.mxu0 0.0
    %424 = vmatprep.subr.mxu0 0.0
    %425 = vmatpush1.msra.mxu0 0.0
    %426 = vmatprep.subr.mxu0 0.0
    %427 = vmatpush1.msra.mxu0 0.0
    %428 = vmatprep.subr.mxu0 0.0
    %429 = vmatpush1.msra.mxu0 0.0
    %430 = vmatprep.subr.mxu0 0.0
    %431 = vmatpush1.msra.mxu0 0.0
    %432 = vmatprep.subr.mxu0 0.0
    %433 = vmatpush1.msra.mxu0 0.0
    %434 = vmatprep.subr.mxu0 0.0
    %435 = vmatpush1.msra.mxu0 0.0
    %436 = vmatprep.subr.mxu0 0.0
    %437 = vmatpush1.msra.mxu0 0.0
    %438 = vmatprep.subr.mxu0 0.0
    %439 = vmatpush1.msra.mxu0 0.0
    %440 = vmatprep.subr.mxu0 0.0
    %441 = vmatpush1.msra.mxu0 0.0
    %442 = vmatprep.subr.mxu0 0.0
    %443 = vmatpush1.msra.mxu0 0.0
    %444 = vmatprep.subr.mxu0 0.0
    %445 = vmatpush1.msra.mxu0 0.0
    %446 = vmatprep.subr.mxu0 0.0
    %447 = vmatpush1.msra.mxu0 0.0
    %448 = vmatprep.subr.mxu0 0.0
    %449 = vmatpush1.msra.mxu0 0.0
    %450 = vmatprep.subr.mxu0 0.0
    %451 = vmatpush1.msra.mxu0 0.0
    %452 = vmatprep.subr.mxu0 0.0
    %453 = vmatpush1.msra.mxu0 0.0
    %454 = vmatprep.subr.mxu0 0.0
    %455 = vmatpush1.msra.mxu0 0.0
    %456 = vmatprep.subr.mxu0 0.0
    %457 = vmatpush1.msra.mxu0 0.0
    %458 = vmatprep.subr.mxu0 0.0
    %459 = vmatpush1.msra.mxu0 0.0
    %460 = vmatprep.subr.mxu0 0.0
    %461 = vmatpush1.msra.mxu0 0.0
    %462 = vmatprep.mubr.f32.mxu0 0.0
    %463 = vmatmul.mubr.f32.gmra.mrb[0].mxu0 %v396
    %v464 = vpop.f32.mrb[0].mxu0
    %v465 = vadd.f32 %v391, %v464
    %v466 = vpop.f32.mrb[0].mxu0
    %v467 = vadd.f32 %v392, %v466
    %468 = vdwg.mxu0
    %v469 = vxor.u32 %v465, 2147483648
    %v470 = vxor.u32 %v467, 2147483648
    %v471 = vmul.f32 %v469, 1.442695
    %v472 = vpow.pop %v471
    %v473 = vmul.f32 %v470, 1.442695
    %v474 = vpow.pop %v473
    %v475 = vadd.f32 %v472, 1.0
    %v476 = vadd.f32 %v474, 1.0
    %v477 = vrcp.pop %v475
    %v478 = vmul.f32 1.0, %v477
    %v479 = vrcp.pop %v476
    %v480 = vmul.f32 1.0, %v479
    %v481 = vtanh.pop %v467
    %v482 = vmul.f32 %v478, %v385
    %v483 = vmul.f32 %v478, %v481
    %485 = vrot.lane.b32.xlu0 %v483, 64
    %v486 = vpop.permute.xlu0 %485
    %v488 = vadd.f32 %v482, %v486
    %v489 = vtanh.pop %v488
    %v490 = vmul.f32 %v480, %v489
    %s491 = smul.u32 3, 2
    %s492 = smul.addr %s491, 8
    %s493 = scalar_lea.vmem [#allocation2], %s492
    %v494 = vld [vmem:[%s493] sm:$0xff]
    %v495 = vld [vmem:[%s493 + $0x8] sm:$0xff]
    %497 = vrot.lane.b32.xlu0 %v490, 64
    %v498 = vpop.permute.xlu0 %497
    %v499 = vsel %vm287, %v498, 0
    %501 = vmatprep.subr.mxu0 %v50
    %502 = vmatpush1.msra.mxu0 %v49
    %503 = vmatprep.subr.mxu0 %v52
    %504 = vmatpush1.msra.mxu0 %v51
    %505 = vmatprep.subr.mxu0 %v54
    %506 = vmatpush1.msra.mxu0 %v53
    %507 = vmatprep.subr.mxu0 %v56
    %508 = vmatpush1.msra.mxu0 %v55
    %509 = vmatprep.subr.mxu0 %v58
    %510 = vmatpush1.msra.mxu0 %v57
    %511 = vmatprep.subr.mxu0 %v60
    %512 = vmatpush1.msra.mxu0 %v59
    %513 = vmatprep.subr.mxu0 %v62
    %514 = vmatpush1.msra.mxu0 %v61
    %515 = vmatprep.subr.mxu0 %v64
    %516 = vmatpush1.msra.mxu0 %v63
    %517 = vmatprep.subr.mxu0 0.0
    %518 = vmatpush1.msra.mxu0 0.0
    %519 = vmatprep.subr.mxu0 0.0
    %520 = vmatpush1.msra.mxu0 0.0
    %521 = vmatprep.subr.mxu0 0.0
    %522 = vmatpush1.msra.mxu0 0.0
    %523 = vmatprep.subr.mxu0 0.0
    %524 = vmatpush1.msra.mxu0 0.0
    %525 = vmatprep.subr.mxu0 0.0
    %526 = vmatpush1.msra.mxu0 0.0
    %527 = vmatprep.subr.mxu0 0.0
    %528 = vmatpush1.msra.mxu0 0.0
    %529 = vmatprep.subr.mxu0 0.0
    %530 = vmatpush1.msra.mxu0 0.0
    %531 = vmatprep.subr.mxu0 0.0
    %532 = vmatpush1.msra.mxu0 0.0
    %533 = vmatprep.subr.mxu0 0.0
    %534 = vmatpush1.msra.mxu0 0.0
    %535 = vmatprep.subr.mxu0 0.0
    %536 = vmatpush1.msra.mxu0 0.0
    %537 = vmatprep.subr.mxu0 0.0
    %538 = vmatpush1.msra.mxu0 0.0
    %539 = vmatprep.subr.mxu0 0.0
    %540 = vmatpush1.msra.mxu0 0.0
    %541 = vmatprep.subr.mxu0 0.0
    %542 = vmatpush1.msra.mxu0 0.0
    %543 = vmatprep.subr.mxu0 0.0
    %544 = vmatpush1.msra.mxu0 0.0
    %545 = vmatprep.subr.mxu0 0.0
    %546 = vmatpush1.msra.mxu0 0.0
    %547 = vmatprep.subr.mxu0 0.0
    %548 = vmatpush1.msra.mxu0 0.0
    %549 = vmatprep.subr.mxu0 0.0
    %550 = vmatpush1.msra.mxu0 0.0
    %551 = vmatprep.subr.mxu0 0.0
    %552 = vmatpush1.msra.mxu0 0.0
    %553 = vmatprep.subr.mxu0 0.0
    %554 = vmatpush1.msra.mxu0 0.0
    %555 = vmatprep.subr.mxu0 0.0
    %556 = vmatpush1.msra.mxu0 0.0
    %557 = vmatprep.subr.mxu0 0.0
    %558 = vmatpush1.msra.mxu0 0.0
    %559 = vmatprep.subr.mxu0 0.0
    %560 = vmatpush1.msra.mxu0 0.0
    %561 = vmatprep.subr.mxu0 0.0
    %562 = vmatpush1.msra.mxu0 0.0
    %563 = vmatprep.subr.mxu0 0.0
    %564 = vmatpush1.msra.mxu0 0.0
    %565 = vmatprep.mubr.f32.mxu0 0.0
    %566 = vmatmul.mubr.f32.gmra.mrb[0].mxu0 %v499
    %v567 = vpop.f32.mrb[0].mxu0
    %v568 = vadd.f32 %v494, %v567
    %v569 = vpop.f32.mrb[0].mxu0
    %v570 = vadd.f32 %v495, %v569
    %571 = vdwg.mxu0
    %v572 = vxor.u32 %v568, 2147483648
    %v573 = vxor.u32 %v570, 2147483648
    %v574 = vmul.f32 %v572, 1.442695
    %v575 = vpow.pop %v574
    %v576 = vmul.f32 %v573, 1.442695
    %v577 = vpow.pop %v576
    %v578 = vadd.f32 %v575, 1.0
    %v579 = vadd.f32 %v577, 1.0
    %v580 = vrcp.pop %v578
    %v581 = vmul.f32 1.0, %v580
    %v582 = vrcp.pop %v579
    %v583 = vmul.f32 1.0, %v582
    %v584 = vtanh.pop %v570
    %v585 = vmul.f32 %v581, %v488
    %v586 = vmul.f32 %v581, %v584
    %588 = vrot.lane.b32.xlu0 %v586, 64
    %v589 = vpop.permute.xlu0 %588
    %v591 = vadd.f32 %v585, %v589
    %v592 = vtanh.pop %v591
    %v593 = vmul.f32 %v583, %v592
    %s594 = smul.u32 4, 2
    %s595 = smul.addr %s594, 8
    %s596 = scalar_lea.vmem [#allocation2], %s595
    %v597 = vld [vmem:[%s596] sm:$0xff]
    %v598 = vld [vmem:[%s596 + $0x8] sm:$0xff]
    %600 = vrot.lane.b32.xlu0 %v593, 64
    %v601 = vpop.permute.xlu0 %600
    %v602 = vsel %vm287, %v601, 0
    %604 = vmatprep.subr.mxu0 %v50
    %605 = vmatpush1.msra.mxu0 %v49
    %606 = vmatprep.subr.mxu0 %v52
    %607 = vmatpush1.msra.mxu0 %v51
    %608 = vmatprep.subr.mxu0 %v54
    %609 = vmatpush1.msra.mxu0 %v53
    %610 = vmatprep.subr.mxu0 %v56
    %611 = vmatpush1.msra.mxu0 %v55
    %612 = vmatprep.subr.mxu0 %v58
    %613 = vmatpush1.msra.mxu0 %v57
    %614 = vmatprep.subr.mxu0 %v60
    %615 = vmatpush1.msra.mxu0 %v59
    %616 = vmatprep.subr.mxu0 %v62
    %617 = vmatpush1.msra.mxu0 %v61
    %618 = vmatprep.subr.mxu0 %v64
    %619 = vmatpush1.msra.mxu0 %v63
    %620 = vmatprep.subr.mxu0 0.0
    %621 = vmatpush1.msra.mxu0 0.0
    %622 = vmatprep.subr.mxu0 0.0
    %623 = vmatpush1.msra.mxu0 0.0
    %624 = vmatprep.subr.mxu0 0.0
    %625 = vmatpush1.msra.mxu0 0.0
    %626 = vmatprep.subr.mxu0 0.0
    %627 = vmatpush1.msra.mxu0 0.0
    %628 = vmatprep.subr.mxu0 0.0
    %629 = vmatpush1.msra.mxu0 0.0
    %630 = vmatprep.subr.mxu0 0.0
    %631 = vmatpush1.msra.mxu0 0.0
    %632 = vmatprep.subr.mxu0 0.0
    %633 = vmatpush1.msra.mxu0 0.0
    %634 = vmatprep.subr.mxu0 0.0
    %635 = vmatpush1.msra.mxu0 0.0
    %636 = vmatprep.subr.mxu0 0.0
    %637 = vmatpush1.msra.mxu0 0.0
    %638 = vmatprep.subr.mxu0 0.0
    %639 = vmatpush1.msra.mxu0 0.0
    %640 = vmatprep.subr.mxu0 0.0
    %641 = vmatpush1.msra.mxu0 0.0
    %642 = vmatprep.subr.mxu0 0.0
    %643 = vmatpush1.msra.mxu0 0.0
    %644 = vmatprep.subr.mxu0 0.0
    %645 = vmatpush1.msra.mxu0 0.0
    %646 = vmatprep.subr.mxu0 0.0
    %647 = vmatpush1.msra.mxu0 0.0
    %648 = vmatprep.subr.mxu0 0.0
    %649 = vmatpush1.msra.mxu0 0.0
    %650 = vmatprep.subr.mxu0 0.0
    %651 = vmatpush1.msra.mxu0 0.0
    %652 = vmatprep.subr.mxu0 0.0
    %653 = vmatpush1.msra.mxu0 0.0
    %654 = vmatprep.subr.mxu0 0.0
    %655 = vmatpush1.msra.mxu0 0.0
    %656 = vmatprep.subr.mxu0 0.0
    %657 = vmatpush1.msra.mxu0 0.0
    %658 = vmatprep.subr.mxu0 0.0
    %659 = vmatpush1.msra.mxu0 0.0
    %660 = vmatprep.subr.mxu0 0.0
    %661 = vmatpush1.msra.mxu0 0.0
    %662 = vmatprep.subr.mxu0 0.0
    %663 = vmatpush1.msra.mxu0 0.0
    %664 = vmatprep.subr.mxu0 0.0
    %665 = vmatpush1.msra.mxu0 0.0
    %666 = vmatprep.subr.mxu0 0.0
    %667 = vmatpush1.msra.mxu0 0.0
    %668 = vmatprep.mubr.f32.mxu0 0.0
    %669 = vmatmul.mubr.f32.gmra.mrb[0].mxu0 %v602
    %v670 = vpop.f32.mrb[0].mxu0
    %v671 = vadd.f32 %v597, %v670
    %v672 = vpop.f32.mrb[0].mxu0
    %v673 = vadd.f32 %v598, %v672
    %674 = vdwg.mxu0
    %v675 = vxor.u32 %v671, 2147483648
    %v676 = vxor.u32 %v673, 2147483648
    %v677 = vmul.f32 %v675, 1.442695
    %v678 = vpow.pop %v677
    %v679 = vmul.f32 %v676, 1.442695
    %v680 = vpow.pop %v679
    %v681 = vadd.f32 %v678, 1.0
    %v682 = vadd.f32 %v680, 1.0
    %v683 = vrcp.pop %v681
    %v684 = vmul.f32 1.0, %v683
    %v685 = vrcp.pop %v682
    %v686 = vmul.f32 1.0, %v685
    %v687 = vtanh.pop %v673
    %v688 = vmul.f32 %v684, %v591
    %v689 = vmul.f32 %v684, %v687
    %691 = vrot.lane.b32.xlu0 %v689, 64
    %v692 = vpop.permute.xlu0 %691
    %v694 = vadd.f32 %v688, %v692
    %v695 = vtanh.pop %v694
    %v696 = vmul.f32 %v686, %v695
    %s697 = smul.u32 5, 2
    %s698 = smul.addr %s697, 8
    %s699 = scalar_lea.vmem [#allocation2], %s698
    %v700 = vld [vmem:[%s699] sm:$0xff]
    %v701 = vld [vmem:[%s699 + $0x8] sm:$0xff]
    %703 = vrot.lane.b32.xlu0 %v696, 64
    %v704 = vpop.permute.xlu0 %703
    %v705 = vsel %vm287, %v704, 0
    %707 = vmatprep.subr.mxu0 %v50
    %708 = vmatpush1.msra.mxu0 %v49
    %709 = vmatprep.subr.mxu0 %v52
    %710 = vmatpush1.msra.mxu0 %v51
    %711 = vmatprep.subr.mxu0 %v54
    %712 = vmatpush1.msra.mxu0 %v53
    %713 = vmatprep.subr.mxu0 %v56
    %714 = vmatpush1.msra.mxu0 %v55
    %715 = vmatprep.subr.mxu0 %v58
    %716 = vmatpush1.msra.mxu0 %v57
    %717 = vmatprep.subr.mxu0 %v60
    %718 = vmatpush1.msra.mxu0 %v59
    %719 = vmatprep.subr.mxu0 %v62
    %720 = vmatpush1.msra.mxu0 %v61
    %721 = vmatprep.subr.mxu0 %v64
    %722 = vmatpush1.msra.mxu0 %v63
    %723 = vmatprep.subr.mxu0 0.0
    %724 = vmatpush1.msra.mxu0 0.0
    %725 = vmatprep.subr.mxu0 0.0
    %726 = vmatpush1.msra.mxu0 0.0
    %727 = vmatprep.subr.mxu0 0.0
    %728 = vmatpush1.msra.mxu0 0.0
    %729 = vmatprep.subr.mxu0 0.0
    %730 = vmatpush1.msra.mxu0 0.0
    %731 = vmatprep.subr.mxu0 0.0
    %732 = vmatpush1.msra.mxu0 0.0
    %733 = vmatprep.subr.mxu0 0.0
    %734 = vmatpush1.msra.mxu0 0.0
    %735 = vmatprep.subr.mxu0 0.0
    %736 = vmatpush1.msra.mxu0 0.0
    %737 = vmatprep.subr.mxu0 0.0
    %738 = vmatpush1.msra.mxu0 0.0
    %739 = vmatprep.subr.mxu0 0.0
    %740 = vmatpush1.msra.mxu0 0.0
    %741 = vmatprep.subr.mxu0 0.0
    %742 = vmatpush1.msra.mxu0 0.0
    %743 = vmatprep.subr.mxu0 0.0
    %744 = vmatpush1.msra.mxu0 0.0
    %745 = vmatprep.subr.mxu0 0.0
    %746 = vmatpush1.msra.mxu0 0.0
    %747 = vmatprep.subr.mxu0 0.0
    %748 = vmatpush1.msra.mxu0 0.0
    %749 = vmatprep.subr.mxu0 0.0
    %750 = vmatpush1.msra.mxu0 0.0
    %751 = vmatprep.subr.mxu0 0.0
    %752 = vmatpush1.msra.mxu0 0.0
    %753 = vmatprep.subr.mxu0 0.0
    %754 = vmatpush1.msra.mxu0 0.0
    %755 = vmatprep.subr.mxu0 0.0
    %756 = vmatpush1.msra.mxu0 0.0
    %757 = vmatprep.subr.mxu0 0.0
    %758 = vmatpush1.msra.mxu0 0.0
    %759 = vmatprep.subr.mxu0 0.0
    %760 = vmatpush1.msra.mxu0 0.0
    %761 = vmatprep.subr.mxu0 0.0
    %762 = vmatpush1.msra.mxu0 0.0
    %763 = vmatprep.subr.mxu0 0.0
    %764 = vmatpush1.msra.mxu0 0.0
    %765 = vmatprep.subr.mxu0 0.0
    %766 = vmatpush1.msra.mxu0 0.0
    %767 = vmatprep.subr.mxu0 0.0
    %768 = vmatpush1.msra.mxu0 0.0
    %769 = vmatprep.subr.mxu0 0.0
    %770 = vmatpush1.msra.mxu0 0.0
    %771 = vmatprep.mubr.f32.mxu0 0.0
    %772 = vmatmul.mubr.f32.gmra.mrb[0].mxu0 %v705
    %v773 = vpop.f32.mrb[0].mxu0
    %v774 = vadd.f32 %v700, %v773
    %v775 = vpop.f32.mrb[0].mxu0
    %v776 = vadd.f32 %v701, %v775
    %777 = vdwg.mxu0
    %v778 = vxor.u32 %v774, 2147483648
    %v779 = vxor.u32 %v776, 2147483648
    %v780 = vmul.f32 %v778, 1.442695
    %v781 = vpow.pop %v780
    %v782 = vmul.f32 %v779, 1.442695
    %v783 = vpow.pop %v782
    %v784 = vadd.f32 %v781, 1.0
    %v785 = vadd.f32 %v783, 1.0
    %v786 = vrcp.pop %v784
    %v787 = vmul.f32 1.0, %v786
    %v788 = vrcp.pop %v785
    %v789 = vmul.f32 1.0, %v788
    %v790 = vtanh.pop %v776
    %v791 = vmul.f32 %v787, %v694
    %v792 = vmul.f32 %v787, %v790
    %794 = vrot.lane.b32.xlu0 %v792, 64
    %v795 = vpop.permute.xlu0 %794
    %v797 = vadd.f32 %v791, %v795
    %v798 = vtanh.pop %v797
    %v799 = vmul.f32 %v789, %v798
    %s800 = smul.u32 6, 2
    %s801 = smul.addr %s800, 8
    %s802 = scalar_lea.vmem [#allocation2], %s801
    %v803 = vld [vmem:[%s802] sm:$0xff]
    %v804 = vld [vmem:[%s802 + $0x8] sm:$0xff]
    %806 = vrot.lane.b32.xlu0 %v799, 64
    %v807 = vpop.permute.xlu0 %806
    %v808 = vsel %vm287, %v807, 0
    %810 = vmatprep.subr.mxu0 %v50
    %811 = vmatpush1.msra.mxu0 %v49
    %812 = vmatprep.subr.mxu0 %v52
    %813 = vmatpush1.msra.mxu0 %v51
    %814 = vmatprep.subr.mxu0 %v54
    %815 = vmatpush1.msra.mxu0 %v53
    %816 = vmatprep.subr.mxu0 %v56
    %817 = vmatpush1.msra.mxu0 %v55
    %818 = vmatprep.subr.mxu0 %v58
    %819 = vmatpush1.msra.mxu0 %v57
    %820 = vmatprep.subr.mxu0 %v60
    %821 = vmatpush1.msra.mxu0 %v59
    %822 = vmatprep.subr.mxu0 %v62
    %823 = vmatpush1.msra.mxu0 %v61
    %824 = vmatprep.subr.mxu0 %v64
    %825 = vmatpush1.msra.mxu0 %v63
    %826 = vmatprep.subr.mxu0 0.0
    %827 = vmatpush1.msra.mxu0 0.0
    %828 = vmatprep.subr.mxu0 0.0
    %829 = vmatpush1.msra.mxu0 0.0
    %830 = vmatprep.subr.mxu0 0.0
    %831 = vmatpush1.msra.mxu0 0.0
    %832 = vmatprep.subr.mxu0 0.0
    %833 = vmatpush1.msra.mxu0 0.0
    %834 = vmatprep.subr.mxu0 0.0
    %835 = vmatpush1.msra.mxu0 0.0
    %836 = vmatprep.subr.mxu0 0.0
    %837 = vmatpush1.msra.mxu0 0.0
    %838 = vmatprep.subr.mxu0 0.0
    %839 = vmatpush1.msra.mxu0 0.0
    %840 = vmatprep.subr.mxu0 0.0
    %841 = vmatpush1.msra.mxu0 0.0
    %842 = vmatprep.subr.mxu0 0.0
    %843 = vmatpush1.msra.mxu0 0.0
    %844 = vmatprep.subr.mxu0 0.0
    %845 = vmatpush1.msra.mxu0 0.0
    %846 = vmatprep.subr.mxu0 0.0
    %847 = vmatpush1.msra.mxu0 0.0
    %848 = vmatprep.subr.mxu0 0.0
    %849 = vmatpush1.msra.mxu0 0.0
    %850 = vmatprep.subr.mxu0 0.0
    %851 = vmatpush1.msra.mxu0 0.0
    %852 = vmatprep.subr.mxu0 0.0
    %853 = vmatpush1.msra.mxu0 0.0
    %854 = vmatprep.subr.mxu0 0.0
    %855 = vmatpush1.msra.mxu0 0.0
    %856 = vmatprep.subr.mxu0 0.0
    %857 = vmatpush1.msra.mxu0 0.0
    %858 = vmatprep.subr.mxu0 0.0
    %859 = vmatpush1.msra.mxu0 0.0
    %860 = vmatprep.subr.mxu0 0.0
    %861 = vmatpush1.msra.mxu0 0.0
    %862 = vmatprep.subr.mxu0 0.0
    %863 = vmatpush1.msra.mxu0 0.0
    %864 = vmatprep.subr.mxu0 0.0
    %865 = vmatpush1.msra.mxu0 0.0
    %866 = vmatprep.subr.mxu0 0.0
    %867 = vmatpush1.msra.mxu0 0.0
    %868 = vmatprep.subr.mxu0 0.0
    %869 = vmatpush1.msra.mxu0 0.0
    %870 = vmatprep.subr.mxu0 0.0
    %871 = vmatpush1.msra.mxu0 0.0
    %872 = vmatprep.subr.mxu0 0.0
    %873 = vmatpush1.msra.mxu0 0.0
    %874 = vmatprep.mubr.f32.mxu0 0.0
    %875 = vmatmul.mubr.f32.gmra.mrb[0].mxu0 %v808
    %v876 = vpop.f32.mrb[0].mxu0
    %v877 = vadd.f32 %v803, %v876
    %v878 = vpop.f32.mrb[0].mxu0
    %v879 = vadd.f32 %v804, %v878
    %880 = vdwg.mxu0
    %v881 = vxor.u32 %v877, 2147483648
    %v882 = vxor.u32 %v879, 2147483648
    %v883 = vmul.f32 %v881, 1.442695
    %v884 = vpow.pop %v883
    %v885 = vmul.f32 %v882, 1.442695
    %v886 = vpow.pop %v885
    %v887 = vadd.f32 %v884, 1.0
    %v888 = vadd.f32 %v886, 1.0
    %v889 = vrcp.pop %v887
    %v890 = vmul.f32 1.0, %v889
    %v891 = vrcp.pop %v888
    %v892 = vmul.f32 1.0, %v891
    %v893 = vtanh.pop %v879
    %v894 = vmul.f32 %v890, %v797
    %v895 = vmul.f32 %v890, %v893
    %897 = vrot.lane.b32.xlu0 %v895, 64
    %v898 = vpop.permute.xlu0 %897
    %v900 = vadd.f32 %v894, %v898
    %v901 = vtanh.pop %v900
    %v902 = vmul.f32 %v892, %v901
    %s903 = smul.u32 7, 2
    %s904 = smul.addr %s903, 8
    %s905 = scalar_lea.vmem [#allocation2], %s904
    %v906 = vld [vmem:[%s905] sm:$0xff]
    %v907 = vld [vmem:[%s905 + $0x8] sm:$0xff]
    %909 = vrot.lane.b32.xlu0 %v902, 64
    %v910 = vpop.permute.xlu0 %909
    %v911 = vsel %vm287, %v910, 0
    %913 = vmatprep.subr.mxu0 %v50
    %914 = vmatpush1.msra.mxu0 %v49
    %915 = vmatprep.subr.mxu0 %v52
    %916 = vmatpush1.msra.mxu0 %v51
    %917 = vmatprep.subr.mxu0 %v54
    %918 = vmatpush1.msra.mxu0 %v53
    %919 = vmatprep.subr.mxu0 %v56
    %920 = vmatpush1.msra.mxu0 %v55
    %921 = vmatprep.subr.mxu0 %v58
    %922 = vmatpush1.msra.mxu0 %v57
    %923 = vmatprep.subr.mxu0 %v60
    %924 = vmatpush1.msra.mxu0 %v59
    %925 = vmatprep.subr.mxu0 %v62
    %926 = vmatpush1.msra.mxu0 %v61
    %927 = vmatprep.subr.mxu0 %v64
    %928 = vmatpush1.msra.mxu0 %v63
    %929 = vmatprep.subr.mxu0 0.0
    %930 = vmatpush1.msra.mxu0 0.0
    %931 = vmatprep.subr.mxu0 0.0
    %932 = vmatpush1.msra.mxu0 0.0
    %933 = vmatprep.subr.mxu0 0.0
    %934 = vmatpush1.msra.mxu0 0.0
    %935 = vmatprep.subr.mxu0 0.0
    %936 = vmatpush1.msra.mxu0 0.0
    %937 = vmatprep.subr.mxu0 0.0
    %938 = vmatpush1.msra.mxu0 0.0
    %939 = vmatprep.subr.mxu0 0.0
    %940 = vmatpush1.msra.mxu0 0.0
    %941 = vmatprep.subr.mxu0 0.0
    %942 = vmatpush1.msra.mxu0 0.0
    %943 = vmatprep.subr.mxu0 0.0
    %944 = vmatpush1.msra.mxu0 0.0
    %945 = vmatprep.subr.mxu0 0.0
    %946 = vmatpush1.msra.mxu0 0.0
    %947 = vmatprep.subr.mxu0 0.0
    %948 = vmatpush1.msra.mxu0 0.0
    %949 = vmatprep.subr.mxu0 0.0
    %950 = vmatpush1.msra.mxu0 0.0
    %951 = vmatprep.subr.mxu0 0.0
    %952 = vmatpush1.msra.mxu0 0.0
    %953 = vmatprep.subr.mxu0 0.0
    %954 = vmatpush1.msra.mxu0 0.0
    %955 = vmatprep.subr.mxu0 0.0
    %956 = vmatpush1.msra.mxu0 0.0
    %957 = vmatprep.subr.mxu0 0.0
    %958 = vmatpush1.msra.mxu0 0.0
    %959 = vmatprep.subr.mxu0 0.0
    %960 = vmatpush1.msra.mxu0 0.0
    %961 = vmatprep.subr.mxu0 0.0
    %962 = vmatpush1.msra.mxu0 0.0
    %963 = vmatprep.subr.mxu0 0.0
    %964 = vmatpush1.msra.mxu0 0.0
    %965 = vmatprep.subr.mxu0 0.0
    %966 = vmatpush1.msra.mxu0 0.0
    %967 = vmatprep.subr.mxu0 0.0
    %968 = vmatpush1.msra.mxu0 0.0
    %969 = vmatprep.subr.mxu0 0.0
    %970 = vmatpush1.msra.mxu0 0.0
    %971 = vmatprep.subr.mxu0 0.0
    %972 = vmatpush1.msra.mxu0 0.0
    %973 = vmatprep.subr.mxu0 0.0
    %974 = vmatpush1.msra.mxu0 0.0
    %975 = vmatprep.subr.mxu0 0.0
    %976 = vmatpush1.msra.mxu0 0.0
    %977 = vmatprep.mubr.f32.mxu0 0.0
    %978 = vmatmul.mubr.f32.gmra.mrb[0].mxu0 %v911
    %v979 = vpop.f32.mrb[0].mxu0
    %v980 = vadd.f32 %v906, %v979
    %v981 = vpop.f32.mrb[0].mxu0
    %v982 = vadd.f32 %v907, %v981
    %983 = vdwg.mxu0
    %v984 = vxor.u32 %v980, 2147483648
    %v985 = vxor.u32 %v982, 2147483648
    %v986 = vmul.f32 %v984, 1.442695
    %v987 = vpow.pop %v986
    %v988 = vmul.f32 %v985, 1.442695
    %v989 = vpow.pop %v988
    %v990 = vadd.f32 %v987, 1.0
    %v991 = vadd.f32 %v989, 1.0
    %v992 = vrcp.pop %v990
    %v993 = vmul.f32 1.0, %v992
    %v994 = vrcp.pop %v991
    %v995 = vmul.f32 1.0, %v994
    %v996 = vtanh.pop %v982
    %v997 = vmul.f32 %v993, %v900
    %v998 = vmul.f32 %v993, %v996
    %1000 = vrot.lane.b32.xlu0 %v998, 64
    %v1001 = vpop.permute.xlu0 %1000
    %v1003 = vadd.f32 %v997, %v1001
    %v1004 = vtanh.pop %v1003
    %v1005 = vmul.f32 %v995, %v1004
    %s1006 = smul.u32 8, 2
    %s1007 = smul.addr %s1006, 8
    %s1008 = scalar_lea.vmem [#allocation2], %s1007
    %v1009 = vld [vmem:[%s1008] sm:$0xff]
    %v1010 = vld [vmem:[%s1008 + $0x8] sm:$0xff]
    %1012 = vrot.lane.b32.xlu0 %v1005, 64
    %v1013 = vpop.permute.xlu0 %1012
    %v1014 = vsel %vm287, %v1013, 0
    %1016 = vmatprep.subr.mxu0 %v50
    %1017 = vmatpush1.msra.mxu0 %v49
    %1018 = vmatprep.subr.mxu0 %v52
    %1019 = vmatpush1.msra.mxu0 %v51
    %1020 = vmatprep.subr.mxu0 %v54
    %1021 = vmatpush1.msra.mxu0 %v53
    %1022 = vmatprep.subr.mxu0 %v56
    %1023 = vmatpush1.msra.mxu0 %v55
    %1024 = vmatprep.subr.mxu0 %v58
    %1025 = vmatpush1.msra.mxu0 %v57
    %1026 = vmatprep.subr.mxu0 %v60
    %1027 = vmatpush1.msra.mxu0 %v59
    %1028 = vmatprep.subr.mxu0 %v62
    %1029 = vmatpush1.msra.mxu0 %v61
    %1030 = vmatprep.subr.mxu0 %v64
    %1031 = vmatpush1.msra.mxu0 %v63
    %1032 = vmatprep.subr.mxu0 0.0
    %1033 = vmatpush1.msra.mxu0 0.0
    %1034 = vmatprep.subr.mxu0 0.0
    %1035 = vmatpush1.msra.mxu0 0.0
    %1036 = vmatprep.subr.mxu0 0.0
    %1037 = vmatpush1.msra.mxu0 0.0
    %1038 = vmatprep.subr.mxu0 0.0
    %1039 = vmatpush1.msra.mxu0 0.0
    %1040 = vmatprep.subr.mxu0 0.0
    %1041 = vmatpush1.msra.mxu0 0.0
    %1042 = vmatprep.subr.mxu0 0.0
    %1043 = vmatpush1.msra.mxu0 0.0
    %1044 = vmatprep.subr.mxu0 0.0
    %1045 = vmatpush1.msra.mxu0 0.0
    %1046 = vmatprep.subr.mxu0 0.0
    %1047 = vmatpush1.msra.mxu0 0.0
    %1048 = vmatprep.subr.mxu0 0.0
    %1049 = vmatpush1.msra.mxu0 0.0
    %1050 = vmatprep.subr.mxu0 0.0
    %1051 = vmatpush1.msra.mxu0 0.0
    %1052 = vmatprep.subr.mxu0 0.0
    %1053 = vmatpush1.msra.mxu0 0.0
    %1054 = vmatprep.subr.mxu0 0.0
    %1055 = vmatpush1.msra.mxu0 0.0
    %1056 = vmatprep.subr.mxu0 0.0
    %1057 = vmatpush1.msra.mxu0 0.0
    %1058 = vmatprep.subr.mxu0 0.0
    %1059 = vmatpush1.msra.mxu0 0.0
    %1060 = vmatprep.subr.mxu0 0.0
    %1061 = vmatpush1.msra.mxu0 0.0
    %1062 = vmatprep.subr.mxu0 0.0
    %1063 = vmatpush1.msra.mxu0 0.0
    %1064 = vmatprep.subr.mxu0 0.0
    %1065 = vmatpush1.msra.mxu0 0.0
    %1066 = vmatprep.subr.mxu0 0.0
    %1067 = vmatpush1.msra.mxu0 0.0
    %1068 = vmatprep.subr.mxu0 0.0
    %1069 = vmatpush1.msra.mxu0 0.0
    %1070 = vmatprep.subr.mxu0 0.0
    %1071 = vmatpush1.msra.mxu0 0.0
    %1072 = vmatprep.subr.mxu0 0.0
    %1073 = vmatpush1.msra.mxu0 0.0
    %1074 = vmatprep.subr.mxu0 0.0
    %1075 = vmatpush1.msra.mxu0 0.0
    %1076 = vmatprep.subr.mxu0 0.0
    %1077 = vmatpush1.msra.mxu0 0.0
    %1078 = vmatprep.subr.mxu0 0.0
    %1079 = vmatpush1.msra.mxu0 0.0
    %1080 = vmatprep.mubr.f32.mxu0 0.0
    %1081 = vmatmul.mubr.f32.gmra.mrb[0].mxu0 %v1014
    %v1082 = vpop.f32.mrb[0].mxu0
    %v1083 = vadd.f32 %v1009, %v1082
    %v1084 = vpop.f32.mrb[0].mxu0
    %v1085 = vadd.f32 %v1010, %v1084
    %1086 = vdwg.mxu0
    %v1087 = vxor.u32 %v1083, 2147483648
    %v1088 = vxor.u32 %v1085, 2147483648
    %v1089 = vmul.f32 %v1087, 1.442695
    %v1090 = vpow.pop %v1089
    %v1091 = vmul.f32 %v1088, 1.442695
    %v1092 = vpow.pop %v1091
    %v1093 = vadd.f32 %v1090, 1.0
    %v1094 = vadd.f32 %v1092, 1.0
    %v1095 = vrcp.pop %v1093
    %v1096 = vmul.f32 1.0, %v1095
    %v1097 = vrcp.pop %v1094
    %v1098 = vmul.f32 1.0, %v1097
    %v1099 = vtanh.pop %v1085
    %v1100 = vmul.f32 %v1096, %v1003
    %v1101 = vmul.f32 %v1096, %v1099
    %1103 = vrot.lane.b32.xlu0 %v1101, 64
    %v1104 = vpop.permute.xlu0 %1103
    %v1106 = vadd.f32 %v1100, %v1104
    %v1107 = vtanh.pop %v1106
    %v1108 = vmul.f32 %v1098, %v1107
    %v1109 = vld [vmem:[#allocation5] sm:$0xff]
    %v1110 = vld [vmem:[#allocation5 + $0x8] sm:$0xff]
    %v1111 = vld [vmem:[#allocation5 + $0x10] sm:$0xff]
    %v1112 = vld [vmem:[#allocation5 + $0x18] sm:$0xff]
    %v1113 = vld [vmem:[#allocation5 + $0x20] sm:$0xff]
    %v1114 = vld [vmem:[#allocation5 + $0x28] sm:$0xff]
    %v1115 = vld [vmem:[#allocation5 + $0x30] sm:$0xff]
    %v1116 = vld [vmem:[#allocation5 + $0x38] sm:$0xff]
    %v1117 = vld [vmem:[%s5] sm:$0x1]
    %v1119 = vlaneseq
    %v1120 = vshrl.u32 %v1119, 7
    %v1121 = vsub.s32 0, %v1120
    %v1122 = vrot.slane %v1117, %v1121
    %1125 = vrot.lane.b32.xlu0 %v1108, 64
    %v1126 = vpop.permute.xlu0 %1125
    %v1127 = vsel %vm287, %v1126, 0
    %1129 = vmatprep.subr.mxu0 0.0
    %1130 = vmatpush1.msra.mxu0 %v1109
    %1131 = vmatprep.subr.mxu0 0.0
    %1132 = vmatpush1.msra.mxu0 %v1110
    %1133 = vmatprep.subr.mxu0 0.0
    %1134 = vmatpush1.msra.mxu0 %v1111
    %1135 = vmatprep.subr.mxu0 0.0
    %1136 = vmatpush1.msra.mxu0 %v1112
    %1137 = vmatprep.subr.mxu0 0.0
    %1138 = vmatpush1.msra.mxu0 %v1113
    %1139 = vmatprep.subr.mxu0 0.0
    %1140 = vmatpush1.msra.mxu0 %v1114
    %1141 = vmatprep.subr.mxu0 0.0
    %1142 = vmatpush1.msra.mxu0 %v1115
    %1143 = vmatprep.subr.mxu0 0.0
    %1144 = vmatpush1.msra.mxu0 %v1116
    %1145 = vmatprep.subr.mxu0 0.0
    %1146 = vmatpush1.msra.mxu0 0.0
    %1147 = vmatprep.subr.mxu0 0.0
    %1148 = vmatpush1.msra.mxu0 0.0
    %1149 = vmatprep.subr.mxu0 0.0
    %1150 = vmatpush1.msra.mxu0 0.0
    %1151 = vmatprep.subr.mxu0 0.0
    %1152 = vmatpush1.msra.mxu0 0.0
    %1153 = vmatprep.subr.mxu0 0.0
    %1154 = vmatpush1.msra.mxu0 0.0
    %1155 = vmatprep.subr.mxu0 0.0
    %1156 = vmatpush1.msra.mxu0 0.0
    %1157 = vmatprep.subr.mxu0 0.0
    %1158 = vmatpush1.msra.mxu0 0.0
    %1159 = vmatprep.subr.mxu0 0.0
    %1160 = vmatpush1.msra.mxu0 0.0
    %1161 = vmatprep.subr.mxu0 0.0
    %1162 = vmatpush1.msra.mxu0 0.0
    %1163 = vmatprep.subr.mxu0 0.0
    %1164 = vmatpush1.msra.mxu0 0.0
    %1165 = vmatprep.subr.mxu0 0.0
    %1166 = vmatpush1.msra.mxu0 0.0
    %1167 = vmatprep.subr.mxu0 0.0
    %1168 = vmatpush1.msra.mxu0 0.0
    %1169 = vmatprep.subr.mxu0 0.0
    %1170 = vmatpush1.msra.mxu0 0.0
    %1171 = vmatprep.subr.mxu0 0.0
    %1172 = vmatpush1.msra.mxu0 0.0
    %1173 = vmatprep.subr.mxu0 0.0
    %1174 = vmatpush1.msra.mxu0 0.0
    %1175 = vmatprep.subr.mxu0 0.0
    %1176 = vmatpush1.msra.mxu0 0.0
    %1177 = vmatprep.subr.mxu0 0.0
    %1178 = vmatpush1.msra.mxu0 0.0
    %1179 = vmatprep.subr.mxu0 0.0
    %1180 = vmatpush1.msra.mxu0 0.0
    %1181 = vmatprep.subr.mxu0 0.0
    %1182 = vmatpush1.msra.mxu0 0.0
    %1183 = vmatprep.subr.mxu0 0.0
    %1184 = vmatpush1.msra.mxu0 0.0
    %1185 = vmatprep.subr.mxu0 0.0
    %1186 = vmatpush1.msra.mxu0 0.0
    %1187 = vmatprep.subr.mxu0 0.0
    %1188 = vmatpush1.msra.mxu0 0.0
    %1189 = vmatprep.subr.mxu0 0.0
    %1190 = vmatpush1.msra.mxu0 0.0
    %1191 = vmatprep.subr.mxu0 0.0
    %1192 = vmatpush1.msra.mxu0 0.0
    %1193 = vmatprep.mubr.f32.mxu0 0.0
    %1194 = vmatmul.mubr.f32.gmra.mrb[0].mxu0 %v1127
    %v1195 = vpop.f32.mrb[0].mxu0
    %v1196 = vadd.f32 %v1122, %v1195
    %v1197 = vpop.f32.mrb[0].mxu0
    %1198 = vdwg.mxu0
    %1199 = vst [vmem:[%s6] sm:$0xff] %v1196
    // Predicated region
    $region34: #{rnn_model_forward.1} parent=1 // pred_check
      _
    $region35: #{rnn_model_forward.1} parent=1 // pred_check_branch
      %1201 = sbr.rel (0) target = $region37
    $region36: #{rnn_model_forward.1} parent=1 // pred_region
      _
    $region37: #{rnn_model_forward.1} parent=1 // pred_fallthru
      _
    // Predicated region
    $region38: #{rnn_model_forward.1} parent=1 // pred_check
      _
    $region39: #{rnn_model_forward.1} parent=1 // pred_check_branch
      %1203 = sbr.rel (0) target = $region41
    $region40: #{rnn_model_forward.1} parent=1 // pred_region
      _
    $region41: #{rnn_model_forward.1} parent=1 // pred_fallthru
      _
    %1204 = vsyncpa [#allocation4], 1
    %1205 = vsyncpa [#allocation6], 1

</llo_original>
